<compile_context>
chip_gen: v5e
topology: v5e:2x2
jax: 0.10.0
libtpu: 0.0.40
codegen_flags: <defaults>
</compile_context>

<pallas_src>
import math
import functools

import jax
import jax.numpy as jnp
from jax import lax
from jax.experimental import pallas as pl
from jax.experimental.pallas import tpu as pltpu


def _layernorm(x, gamma, beta, eps=1e-5):
    # LayerNorm over the last dim, biased variance (matches torch.nn.LayerNorm).
    mean = jnp.mean(x, axis=-1, keepdims=True)
    var = jnp.mean((x - mean) ** 2, axis=-1, keepdims=True)
    return (x - mean) * lax.rsqrt(var + eps) * gamma + beta


def _ttransformer_kernel(heads, head_dim, seq_len,
                         v_ref, k_ref, q_ref,
                         wv_ref, wk_ref, wq_ref,
                         wfc_ref, bfc_ref,
                         g1_ref, be1_ref,
                         w1_ref, b1_ref,
                         w2_ref, b2_ref,
                         g2_ref, be2_ref,
                         o_ref,
                         attn_ref):
    rows, E = q_ref.shape            # rows = B_TILE * T
    T = seq_len
    B = rows // T
    H, D = heads, head_dim
    mm_dt = wv_ref.dtype             # matmul operand dtype (f32 or bf16)

    v = v_ref[...]                   # (rows, E) f32
    k = k_ref[...]
    q = q_ref[...]

    # Batched projections over the whole (rows, E) slab (MXU-utilization lever).
    V = jnp.dot(v.astype(mm_dt), wv_ref[...], preferred_element_type=jnp.float32)
    K = jnp.dot(k.astype(mm_dt), wk_ref[...], preferred_element_type=jnp.float32)
    Q = jnp.dot(q.astype(mm_dt), wq_ref[...], preferred_element_type=jnp.float32)

    # Fold the 1/sqrt(embed_size) attention scale into Q once.
    Q = Q * (1.0 / math.sqrt(E))

    # Per-(batch, head) attention; B and H are small & static -> unrolled.
    for b in range(B):
        r0 = b * T
        for h in range(H):
            c0 = h * D
            Qh = Q[r0:r0 + T, c0:c0 + D]
            Kh = K[r0:r0 + T, c0:c0 + D]
            Vh = V[r0:r0 + T, c0:c0 + D]
            # Contract last dims directly: no explicit Kh.T / XLU transpose.
            s = lax.dot_general(Qh.astype(mm_dt), Kh.astype(mm_dt),
                                dimension_numbers=(((1,), (1,)), ((), ())),
                                preferred_element_type=jnp.float32)   # (T, T)
            s = s - jnp.max(s, axis=-1, keepdims=True)
            p = jnp.exp(s)
            denom = jnp.sum(p, axis=-1, keepdims=True)
            p = p * pl.reciprocal(denom, approx=True)                 # EUP, not VALU div
            o_bh = jnp.dot(p.astype(mm_dt), Vh.astype(mm_dt),
                           preferred_element_type=jnp.float32)        # (T, D)
            # Write this head in place -> no lane-axis concatenate.
            attn_ref[r0:r0 + T, c0:c0 + D] = o_bh

    attn = attn_ref[...]                                              # (rows, E)

    # fc_out
    attn_out = jnp.dot(attn.astype(mm_dt), wfc_ref[...],
                       preferred_element_type=jnp.float32) + bfc_ref[...]

    # residual + norm1 (dropout == identity in eval)
    x1 = _layernorm(attn_out + q, g1_ref[...], be1_ref[...])

    # feed-forward: Linear -> ReLU -> Linear (batched over the whole slab)
    h1 = jnp.maximum(
        jnp.dot(x1.astype(mm_dt), w1_ref[...],
                preferred_element_type=jnp.float32) + b1_ref[...], 0.0)
    ff = jnp.dot(h1.astype(mm_dt), w2_ref[...],
                 preferred_element_type=jnp.float32) + b2_ref[...]

    # residual + norm2 (dropout == identity)
    out = _layernorm(ff + x1, g2_ref[...], be2_ref[...])
    o_ref[...] = out.astype(o_ref.dtype)


def _pick_batch_tile(N, T, target_rows=256, max_rows=2048):
    """Largest useful batch tile: aim for >=target_rows MXU rows per matmul."""
    divisors = [b for b in range(1, N + 1) if N % b == 0]
    for b in divisors:
        if b * T >= target_rows:
            return b
    fitting = [b for b in divisors if b * T <= max_rows]
    return fitting[-1] if fitting else 1


def ttransformer_forward(value, key, query, params, heads, *,
                         batch_tile=None, matmul_dtype=jnp.float32):
    N, T, E = query.shape
    head_dim = E // heads
    FE = params["w1"].shape[1]

    if batch_tile is None:
        batch_tile = _pick_batch_tile(N, T)
    assert N % batch_tile == 0, "batch_tile must divide N"
    B = batch_tile
    rows = B * T

    # Flatten (N, T, E) -> (N*T, E) so each grid step sees a lane-dense
    # (rows, E) slab.  TODO(synk): for E < 128 the output store is still a
    # masked (sub-128-lane) vst; pack T into lanes for tiny-E configs.
    v2 = value.reshape(N * T, E)
    k2 = key.reshape(N * T, E)
    q2 = query.reshape(N * T, E)

    io_spec = pl.BlockSpec((rows, E), lambda n: (n, 0))
    # Parameters: whole array resident in VMEM, single-buffered (constant
    # block index across the grid -> nothing to prefetch).
    vmem_spec = pl.BlockSpec(memory_space=pltpu.MemorySpace.VMEM)

    param_order = ["wv", "wk", "wq", "wfc", "bfc",
                   "g1", "be1", "w1", "b1", "w2", "b2", "g2", "be2"]
    mm_weights = {"wv", "wk", "wq", "wfc", "w1", "w2"}
    param_args = [params[k].astype(matmul_dtype) if k in mm_weights else params[k]
                  for k in param_order]
    param_specs = [vmem_spec] * len(param_args)

    kernel = functools.partial(_ttransformer_kernel, heads, head_dim, T)

    # Explicit VMEM budget (double-buffered I/O + resident params + scratch +
    # rough intermediates), with headroom, capped below physical VMEM.
    f32b = 4
    io_bytes = 2 * 4 * rows * E * f32b                 # 3 inputs + 1 output, x2 buffers
    param_bytes = sum(int(p.size) * p.dtype.itemsize for p in param_args)
    interm_bytes = rows * (4 * E + FE) * f32b + 2 * T * T * f32b + rows * E * f32b
    vmem_limit = int(min(64 * 2 ** 20,
                         max(8 * 2 ** 20,
                             2 * (io_bytes + param_bytes + interm_bytes))))

    out2d = pl.pallas_call(
        kernel,
        out_shape=jax.ShapeDtypeStruct((N * T, E), query.dtype),
        grid_spec=pltpu.PrefetchScalarGridSpec(
            num_scalar_prefetch=0,
            grid=(N // B,),
            in_specs=[io_spec, io_spec, io_spec] + param_specs,
            out_specs=io_spec,
            scratch_shapes=[pltpu.VMEM((rows, E), jnp.float32)],
        ),
        compiler_params=pltpu.CompilerParams(
            dimension_semantics=("parallel",),
            vmem_limit_bytes=vmem_limit),
    )(v2, k2, q2, *param_args)
    return out2d.reshape(N, T, E)


def init_params(rng, embed_size, heads, forward_expansion):
    D = embed_size // heads
    FE = forward_expansion * embed_size
    keys = jax.random.split(rng, 12)

    def lin(k, fan_in, shape):
        bound = 1.0 / math.sqrt(fan_in)
        return jax.random.uniform(k, shape, jnp.float32, -bound, bound)

    # Per-head projection weights (in, out) = (D, D), folded into block-diag (E, E).
    wv_h = lin(keys[0], D, (D, D))
    wk_h = lin(keys[1], D, (D, D))
    wq_h = lin(keys[2], D, (D, D))

    def block_diag(w):
        big = jnp.zeros((embed_size, embed_size), jnp.float32)
        for h in range(heads):
            big = big.at[h * D:(h + 1) * D, h * D:(h + 1) * D].set(w)
        return big

    params = {
        "wv": block_diag(wv_h),
        "wk": block_diag(wk_h),
        "wq": block_diag(wq_h),
        "wfc": lin(keys[3], embed_size, (embed_size, embed_size)),
        "bfc": lin(keys[4], embed_size, (1, embed_size)),
        "g1": jnp.ones((1, embed_size), jnp.float32),
        "be1": jnp.zeros((1, embed_size), jnp.float32),
        "w1": lin(keys[5], embed_size, (embed_size, FE)),
        "b1": lin(keys[6], embed_size, (1, FE)),
        "w2": lin(keys[7], FE, (FE, embed_size)),
        "b2": lin(keys[8], FE, (1, embed_size)),
        "g2": jnp.ones((1, embed_size), jnp.float32),
        "be2": jnp.zeros((1, embed_size), jnp.float32),
    }
    return params


def reference_forward(value, key, query, params, heads):
    """Pure-JAX reference mirroring the PyTorch forward (eval mode)."""
    N, T, E = query.shape
    D = E // heads

    V = value @ params["wv"]
    K = key @ params["wk"]
    Q = query @ params["wq"]
    V4 = V.reshape(N, T, heads, D)
    K4 = K.reshape(N, T, heads, D)
    Q4 = Q.reshape(N, T, heads, D)
    energy = jnp.einsum("nqhd,nkhd->nqkh", Q4, K4)
    attn = jax.nn.softmax(energy / math.sqrt(E), axis=2)
    out = jnp.einsum("nqkh,nkhd->nqhd", attn, V4).reshape(N, T, E)
    out = out @ params["wfc"] + params["bfc"]

    def ln(x, g, b, eps=1e-5):
        m = jnp.mean(x, -1, keepdims=True)
        v = jnp.mean((x - m) ** 2, -1, keepdims=True)
        return (x - m) / jnp.sqrt(v + eps) * g + b

    x1 = ln(out + query, params["g1"], params["be1"])
    h1 = jnp.maximum(x1 @ params["w1"] + params["b1"], 0.0)
    ff = h1 @ params["w2"] + params["b2"]
    return ln(ff + x1, params["g2"], params["be2"])


if __name__ == "__main__":
    N, T = 2, 8
    embed_size, heads, forward_expansion = 32, 4, 4
    dropout = 0.1  # identity at inference

    root = jax.random.PRNGKey(0)
    k_v, k_k, k_q, k_p = jax.random.split(root, 4)
    value = jax.random.normal(k_v, (N, T, embed_size), jnp.float32)
    key = jax.random.normal(k_k, (N, T, embed_size), jnp.float32)
    query = jax.random.normal(k_q, (N, T, embed_size), jnp.float32)

    params = init_params(k_p, embed_size, heads, forward_expansion)

    out = ttransformer_forward(value, key, query, params, heads)
    out = jax.block_until_ready(out)

    ref = reference_forward(value, key, query, params, heads)
    assert out.shape == (N, T, embed_size)
    assert jnp.allclose(out, ref, atol=2e-3, rtol=2e-3), "mismatch vs reference"

    print("KERNEL_OK")
</pallas_src>

<mosaic_0001>
module attributes {stable_mosaic.version = 11 : i64} {
  func.func @_ttransformer_kernel(%arg0: i32, %arg1: memref<16x32xf32, #tpu.memory_space<vmem>>, %arg2: memref<16x32xf32, #tpu.memory_space<vmem>>, %arg3: memref<16x32xf32, #tpu.memory_space<vmem>>, %arg4: memref<32x32xf32, #tpu.memory_space<vmem>>, %arg5: memref<32x32xf32, #tpu.memory_space<vmem>>, %arg6: memref<32x32xf32, #tpu.memory_space<vmem>>, %arg7: memref<32x32xf32, #tpu.memory_space<vmem>>, %arg8: memref<1x32xf32, #tpu.memory_space<vmem>>, %arg9: memref<1x32xf32, #tpu.memory_space<vmem>>, %arg10: memref<1x32xf32, #tpu.memory_space<vmem>>, %arg11: memref<32x128xf32, #tpu.memory_space<vmem>>, %arg12: memref<1x128xf32, #tpu.memory_space<vmem>>, %arg13: memref<128x32xf32, #tpu.memory_space<vmem>>, %arg14: memref<1x32xf32, #tpu.memory_space<vmem>>, %arg15: memref<1x32xf32, #tpu.memory_space<vmem>>, %arg16: memref<1x32xf32, #tpu.memory_space<vmem>>, %arg17: memref<16x32xf32, #tpu.memory_space<vmem>>, %arg18: memref<16x32xf32, #tpu.memory_space<vmem>>) attributes {dimension_semantics = [#tpu.dimension_semantics<parallel>], iteration_bounds = array<i64: 1>, scalar_prefetch = 0 : i64, scratch_operands = 1 : i64, tpu.core_type = #tpu.core_type<tc>, window_params = [{transform_indices = @transform_0, window_bounds = array<i64: 16, 32>}, {transform_indices = @transform_1, window_bounds = array<i64: 16, 32>}, {transform_indices = @transform_2, window_bounds = array<i64: 16, 32>}, {pipeline_mode = #tpu.pipeline_mode<synchronous>, transform_indices = @transform_3, window_bounds = array<i64: 32, 32>}, {pipeline_mode = #tpu.pipeline_mode<synchronous>, transform_indices = @transform_4, window_bounds = array<i64: 32, 32>}, {pipeline_mode = #tpu.pipeline_mode<synchronous>, transform_indices = @transform_5, window_bounds = array<i64: 32, 32>}, {pipeline_mode = #tpu.pipeline_mode<synchronous>, transform_indices = @transform_6, window_bounds = array<i64: 32, 32>}, {pipeline_mode = #tpu.pipeline_mode<synchronous>, transform_indices = @transform_7, window_bounds = array<i64: 1, 32>}, {pipeline_mode = #tpu.pipeline_mode<synchronous>, transform_indices = @transform_8, window_bounds = array<i64: 1, 32>}, {pipeline_mode = #tpu.pipeline_mode<synchronous>, transform_indices = @transform_9, window_bounds = array<i64: 1, 32>}, {pipeline_mode = #tpu.pipeline_mode<synchronous>, transform_indices = @transform_10, window_bounds = array<i64: 32, 128>}, {pipeline_mode = #tpu.pipeline_mode<synchronous>, transform_indices = @transform_11, window_bounds = array<i64: 1, 128>}, {pipeline_mode = #tpu.pipeline_mode<synchronous>, transform_indices = @transform_12, window_bounds = array<i64: 128, 32>}, {pipeline_mode = #tpu.pipeline_mode<synchronous>, transform_indices = @transform_13, window_bounds = array<i64: 1, 32>}, {pipeline_mode = #tpu.pipeline_mode<synchronous>, transform_indices = @transform_14, window_bounds = array<i64: 1, 32>}, {pipeline_mode = #tpu.pipeline_mode<synchronous>, transform_indices = @transform_15, window_bounds = array<i64: 1, 32>}, {transform_indices = @transform_16, window_bounds = array<i64: 16, 32>}]} {
    %c0 = arith.constant 0 : index
    %c0_0 = arith.constant 0 : index
    %0 = vector.load %arg1[%c0, %c0_0] : memref<16x32xf32, #tpu.memory_space<vmem>>, vector<16x32xf32>
    %c0_1 = arith.constant 0 : index
    %c0_2 = arith.constant 0 : index
    %1 = vector.load %arg2[%c0_1, %c0_2] : memref<16x32xf32, #tpu.memory_space<vmem>>, vector<16x32xf32>
    %c0_3 = arith.constant 0 : index
    %c0_4 = arith.constant 0 : index
    %2 = vector.load %arg3[%c0_3, %c0_4] : memref<16x32xf32, #tpu.memory_space<vmem>>, vector<16x32xf32>
    %c0_5 = arith.constant 0 : index
    %c0_6 = arith.constant 0 : index
    %3 = vector.load %arg4[%c0_5, %c0_6] : memref<32x32xf32, #tpu.memory_space<vmem>>, vector<32x32xf32>
    %cst = arith.constant dense<0.000000e+00> : vector<16x32xf32>
    %4 = tpu.matmul %0, %3, %cst {dimension_numbers = #tpu.dot_dimension_numbers<[1], [0], [0], [1], [0, 0, 1, 1], [], []>} : vector<16x32xf32>, vector<32x32xf32>, vector<16x32xf32> -> vector<16x32xf32>
    %c0_7 = arith.constant 0 : index
    %c0_8 = arith.constant 0 : index
    %5 = vector.load %arg5[%c0_7, %c0_8] : memref<32x32xf32, #tpu.memory_space<vmem>>, vector<32x32xf32>
    %cst_9 = arith.constant dense<0.000000e+00> : vector<16x32xf32>
    %6 = tpu.matmul %1, %5, %cst_9 {dimension_numbers = #tpu.dot_dimension_numbers<[1], [0], [0], [1], [0, 0, 1, 1], [], []>} : vector<16x32xf32>, vector<32x32xf32>, vector<16x32xf32> -> vector<16x32xf32>
    %c0_10 = arith.constant 0 : index
    %c0_11 = arith.constant 0 : index
    %7 = vector.load %arg6[%c0_10, %c0_11] : memref<32x32xf32, #tpu.memory_space<vmem>>, vector<32x32xf32>
    %cst_12 = arith.constant dense<0.000000e+00> : vector<16x32xf32>
    %8 = tpu.matmul %2, %7, %cst_12 {dimension_numbers = #tpu.dot_dimension_numbers<[1], [0], [0], [1], [0, 0, 1, 1], [], []>} : vector<16x32xf32>, vector<32x32xf32>, vector<16x32xf32> -> vector<16x32xf32>
    %cst_13 = arith.constant 0.176776692 : f32
    %9 = vector.broadcast %cst_13 : f32 to vector<16x32xf32>
    %10 = arith.mulf %8, %9 : vector<16x32xf32>
    %11 = vector.extract_strided_slice %10 {offsets = [0, 0], sizes = [8, 8], strides = [1, 1]} : vector<16x32xf32> to vector<8x8xf32>
    %12 = vector.extract_strided_slice %6 {offsets = [0, 0], sizes = [8, 8], strides = [1, 1]} : vector<16x32xf32> to vector<8x8xf32>
    %13 = vector.extract_strided_slice %4 {offsets = [0, 0], sizes = [8, 8], strides = [1, 1]} : vector<16x32xf32> to vector<8x8xf32>
    %cst_14 = arith.constant dense<0.000000e+00> : vector<8x8xf32>
    %14 = tpu.matmul %11, %12, %cst_14 {dimension_numbers = #tpu.dot_dimension_numbers<[1], [1], [0], [0], [0, 0, 1, 0], [], []>} : vector<8x8xf32>, vector<8x8xf32>, vector<8x8xf32> -> vector<8x8xf32>
    %cst_15 = arith.constant dense<0xFF800000> : vector<8xf32>
    %15 = vector.multi_reduction <maximumf>, %14, %cst_15 [1] : vector<8x8xf32> to vector<8xf32>
    %16 = vector.shape_cast %15 : vector<8xf32> to vector<8x1xf32>
    %17 = vector.broadcast %16 : vector<8x1xf32> to vector<8x8xf32>
    %18 = arith.subf %14, %17 : vector<8x8xf32>
    %19 = math.exp %18 : vector<8x8xf32>
    %cst_16 = arith.constant dense<0.000000e+00> : vector<8xf32>
    %20 = vector.multi_reduction <add>, %19, %cst_16 [1] : vector<8x8xf32> to vector<8xf32>
    %21 = vector.shape_cast %20 : vector<8xf32> to vector<8x1xf32>
    %22 = tpu.reciprocal %21 {approx = true} : vector<8x1xf32> -> vector<8x1xf32>
    %23 = vector.broadcast %22 : vector<8x1xf32> to vector<8x8xf32>
    %24 = arith.mulf %19, %23 : vector<8x8xf32>
    %cst_17 = arith.constant dense<0.000000e+00> : vector<8x8xf32>
    %25 = tpu.matmul %24, %13, %cst_17 {dimension_numbers = #tpu.dot_dimension_numbers<[1], [0], [0], [1], [0, 0, 1, 1], [], []>} : vector<8x8xf32>, vector<8x8xf32>, vector<8x8xf32> -> vector<8x8xf32>
    %c0_18 = arith.constant 0 : index
    %c0_19 = arith.constant 0 : index
    %26 = vector.load %arg18[%c0_18, %c0_19] : memref<16x32xf32, #tpu.memory_space<vmem>>, vector<8x8xf32>
    tpu.vector_store %arg18[%c0_18, %c0_19], %25 {strides = array<i32>} : memref<16x32xf32, #tpu.memory_space<vmem>>, vector<8x8xf32>,
    %27 = vector.extract_strided_slice %10 {offsets = [0, 8], sizes = [8, 8], strides = [1, 1]} : vector<16x32xf32> to vector<8x8xf32>
    %28 = vector.extract_strided_slice %6 {offsets = [0, 8], sizes = [8, 8], strides = [1, 1]} : vector<16x32xf32> to vector<8x8xf32>
    %29 = vector.extract_strided_slice %4 {offsets = [0, 8], sizes = [8, 8], strides = [1, 1]} : vector<16x32xf32> to vector<8x8xf32>
    %cst_20 = arith.constant dense<0.000000e+00> : vector<8x8xf32>
    %30 = tpu.matmul %27, %28, %cst_20 {dimension_numbers = #tpu.dot_dimension_numbers<[1], [1], [0], [0], [0, 0, 1, 0], [], []>} : vector<8x8xf32>, vector<8x8xf32>, vector<8x8xf32> -> vector<8x8xf32>
    %cst_21 = arith.constant dense<0xFF800000> : vector<8xf32>
    %31 = vector.multi_reduction <maximumf>, %30, %cst_21 [1] : vector<8x8xf32> to vector<8xf32>
    %32 = vector.shape_cast %31 : vector<8xf32> to vector<8x1xf32>
    %33 = vector.broadcast %32 : vector<8x1xf32> to vector<8x8xf32>
    %34 = arith.subf %30, %33 : vector<8x8xf32>
    %35 = math.exp %34 : vector<8x8xf32>
    %cst_22 = arith.constant dense<0.000000e+00> : vector<8xf32>
    %36 = vector.multi_reduction <add>, %35, %cst_22 [1] : vector<8x8xf32> to vector<8xf32>
    %37 = vector.shape_cast %36 : vector<8xf32> to vector<8x1xf32>
    %38 = tpu.reciprocal %37 {approx = true} : vector<8x1xf32> -> vector<8x1xf32>
    %39 = vector.broadcast %38 : vector<8x1xf32> to vector<8x8xf32>
    %40 = arith.mulf %35, %39 : vector<8x8xf32>
    %cst_23 = arith.constant dense<0.000000e+00> : vector<8x8xf32>
    %41 = tpu.matmul %40, %29, %cst_23 {dimension_numbers = #tpu.dot_dimension_numbers<[1], [0], [0], [1], [0, 0, 1, 1], [], []>} : vector<8x8xf32>, vector<8x8xf32>, vector<8x8xf32> -> vector<8x8xf32>
    %c0_24 = arith.constant 0 : index
    %c8 = arith.constant 8 : index
    %42 = vector.load %arg18[%c0_24, %c8] : memref<16x32xf32, #tpu.memory_space<vmem>>, vector<8x8xf32>
    tpu.vector_store %arg18[%c0_24, %c8], %41 {strides = array<i32>} : memref<16x32xf32, #tpu.memory_space<vmem>>, vector<8x8xf32>,
    %43 = vector.extract_strided_slice %10 {offsets = [0, 16], sizes = [8, 8], strides = [1, 1]} : vector<16x32xf32> to vector<8x8xf32>
    %44 = vector.extract_strided_slice %6 {offsets = [0, 16], sizes = [8, 8], strides = [1, 1]} : vector<16x32xf32> to vector<8x8xf32>
    %45 = vector.extract_strided_slice %4 {offsets = [0, 16], sizes = [8, 8], strides = [1, 1]} : vector<16x32xf32> to vector<8x8xf32>
    %cst_25 = arith.constant dense<0.000000e+00> : vector<8x8xf32>
    %46 = tpu.matmul %43, %44, %cst_25 {dimension_numbers = #tpu.dot_dimension_numbers<[1], [1], [0], [0], [0, 0, 1, 0], [], []>} : vector<8x8xf32>, vector<8x8xf32>, vector<8x8xf32> -> vector<8x8xf32>
    %cst_26 = arith.constant dense<0xFF800000> : vector<8xf32>
    %47 = vector.multi_reduction <maximumf>, %46, %cst_26 [1] : vector<8x8xf32> to vector<8xf32>
    %48 = vector.shape_cast %47 : vector<8xf32> to vector<8x1xf32>
    %49 = vector.broadcast %48 : vector<8x1xf32> to vector<8x8xf32>
    %50 = arith.subf %46, %49 : vector<8x8xf32>
    %51 = math.exp %50 : vector<8x8xf32>
    %cst_27 = arith.constant dense<0.000000e+00> : vector<8xf32>
    %52 = vector.multi_reduction <add>, %51, %cst_27 [1] : vector<8x8xf32> to vector<8xf32>
    %53 = vector.shape_cast %52 : vector<8xf32> to vector<8x1xf32>
    %54 = tpu.reciprocal %53 {approx = true} : vector<8x1xf32> -> vector<8x1xf32>
    %55 = vector.broadcast %54 : vector<8x1xf32> to vector<8x8xf32>
    %56 = arith.mulf %51, %55 : vector<8x8xf32>
    %cst_28 = arith.constant dense<0.000000e+00> : vector<8x8xf32>
    %57 = tpu.matmul %56, %45, %cst_28 {dimension_numbers = #tpu.dot_dimension_numbers<[1], [0], [0], [1], [0, 0, 1, 1], [], []>} : vector<8x8xf32>, vector<8x8xf32>, vector<8x8xf32> -> vector<8x8xf32>
    %c0_29 = arith.constant 0 : index
    %c16 = arith.constant 16 : index
    %58 = vector.load %arg18[%c0_29, %c16] : memref<16x32xf32, #tpu.memory_space<vmem>>, vector<8x8xf32>
    tpu.vector_store %arg18[%c0_29, %c16], %57 {strides = array<i32>} : memref<16x32xf32, #tpu.memory_space<vmem>>, vector<8x8xf32>,
    %59 = vector.extract_strided_slice %10 {offsets = [0, 24], sizes = [8, 8], strides = [1, 1]} : vector<16x32xf32> to vector<8x8xf32>
    %60 = vector.extract_strided_slice %6 {offsets = [0, 24], sizes = [8, 8], strides = [1, 1]} : vector<16x32xf32> to vector<8x8xf32>
    %61 = vector.extract_strided_slice %4 {offsets = [0, 24], sizes = [8, 8], strides = [1, 1]} : vector<16x32xf32> to vector<8x8xf32>
    %cst_30 = arith.constant dense<0.000000e+00> : vector<8x8xf32>
    %62 = tpu.matmul %59, %60, %cst_30 {dimension_numbers = #tpu.dot_dimension_numbers<[1], [1], [0], [0], [0, 0, 1, 0], [], []>} : vector<8x8xf32>, vector<8x8xf32>, vector<8x8xf32> -> vector<8x8xf32>
    %cst_31 = arith.constant dense<0xFF800000> : vector<8xf32>
    %63 = vector.multi_reduction <maximumf>, %62, %cst_31 [1] : vector<8x8xf32> to vector<8xf32>
    %64 = vector.shape_cast %63 : vector<8xf32> to vector<8x1xf32>
    %65 = vector.broadcast %64 : vector<8x1xf32> to vector<8x8xf32>
    %66 = arith.subf %62, %65 : vector<8x8xf32>
    %67 = math.exp %66 : vector<8x8xf32>
    %cst_32 = arith.constant dense<0.000000e+00> : vector<8xf32>
    %68 = vector.multi_reduction <add>, %67, %cst_32 [1] : vector<8x8xf32> to vector<8xf32>
    %69 = vector.shape_cast %68 : vector<8xf32> to vector<8x1xf32>
    %70 = tpu.reciprocal %69 {approx = true} : vector<8x1xf32> -> vector<8x1xf32>
    %71 = vector.broadcast %70 : vector<8x1xf32> to vector<8x8xf32>
    %72 = arith.mulf %67, %71 : vector<8x8xf32>
    %cst_33 = arith.constant dense<0.000000e+00> : vector<8x8xf32>
    %73 = tpu.matmul %72, %61, %cst_33 {dimension_numbers = #tpu.dot_dimension_numbers<[1], [0], [0], [1], [0, 0, 1, 1], [], []>} : vector<8x8xf32>, vector<8x8xf32>, vector<8x8xf32> -> vector<8x8xf32>
    %c0_34 = arith.constant 0 : index
    %c24 = arith.constant 24 : index
    %74 = vector.load %arg18[%c0_34, %c24] : memref<16x32xf32, #tpu.memory_space<vmem>>, vector<8x8xf32>
    tpu.vector_store %arg18[%c0_34, %c24], %73 {strides = array<i32>} : memref<16x32xf32, #tpu.memory_space<vmem>>, vector<8x8xf32>,
    %75 = vector.extract_strided_slice %10 {offsets = [8, 0], sizes = [8, 8], strides = [1, 1]} : vector<16x32xf32> to vector<8x8xf32>
    %76 = vector.extract_strided_slice %6 {offsets = [8, 0], sizes = [8, 8], strides = [1, 1]} : vector<16x32xf32> to vector<8x8xf32>
    %77 = vector.extract_strided_slice %4 {offsets = [8, 0], sizes = [8, 8], strides = [1, 1]} : vector<16x32xf32> to vector<8x8xf32>
    %cst_35 = arith.constant dense<0.000000e+00> : vector<8x8xf32>
    %78 = tpu.matmul %75, %76, %cst_35 {dimension_numbers = #tpu.dot_dimension_numbers<[1], [1], [0], [0], [0, 0, 1, 0], [], []>} : vector<8x8xf32>, vector<8x8xf32>, vector<8x8xf32> -> vector<8x8xf32>
    %cst_36 = arith.constant dense<0xFF800000> : vector<8xf32>
    %79 = vector.multi_reduction <maximumf>, %78, %cst_36 [1] : vector<8x8xf32> to vector<8xf32>
    %80 = vector.shape_cast %79 : vector<8xf32> to vector<8x1xf32>
    %81 = vector.broadcast %80 : vector<8x1xf32> to vector<8x8xf32>
    %82 = arith.subf %78, %81 : vector<8x8xf32>
    %83 = math.exp %82 : vector<8x8xf32>
    %cst_37 = arith.constant dense<0.000000e+00> : vector<8xf32>
    %84 = vector.multi_reduction <add>, %83, %cst_37 [1] : vector<8x8xf32> to vector<8xf32>
    %85 = vector.shape_cast %84 : vector<8xf32> to vector<8x1xf32>
    %86 = tpu.reciprocal %85 {approx = true} : vector<8x1xf32> -> vector<8x1xf32>
    %87 = vector.broadcast %86 : vector<8x1xf32> to vector<8x8xf32>
    %88 = arith.mulf %83, %87 : vector<8x8xf32>
    %cst_38 = arith.constant dense<0.000000e+00> : vector<8x8xf32>
    %89 = tpu.matmul %88, %77, %cst_38 {dimension_numbers = #tpu.dot_dimension_numbers<[1], [0], [0], [1], [0, 0, 1, 1], [], []>} : vector<8x8xf32>, vector<8x8xf32>, vector<8x8xf32> -> vector<8x8xf32>
    %c8_39 = arith.constant 8 : index
    %c0_40 = arith.constant 0 : index
    %90 = vector.load %arg18[%c8_39, %c0_40] : memref<16x32xf32, #tpu.memory_space<vmem>>, vector<8x8xf32>
    tpu.vector_store %arg18[%c8_39, %c0_40], %89 {strides = array<i32>} : memref<16x32xf32, #tpu.memory_space<vmem>>, vector<8x8xf32>,
    %91 = vector.extract_strided_slice %10 {offsets = [8, 8], sizes = [8, 8], strides = [1, 1]} : vector<16x32xf32> to vector<8x8xf32>
    %92 = vector.extract_strided_slice %6 {offsets = [8, 8], sizes = [8, 8], strides = [1, 1]} : vector<16x32xf32> to vector<8x8xf32>
    %93 = vector.extract_strided_slice %4 {offsets = [8, 8], sizes = [8, 8], strides = [1, 1]} : vector<16x32xf32> to vector<8x8xf32>
    %cst_41 = arith.constant dense<0.000000e+00> : vector<8x8xf32>
    %94 = tpu.matmul %91, %92, %cst_41 {dimension_numbers = #tpu.dot_dimension_numbers<[1], [1], [0], [0], [0, 0, 1, 0], [], []>} : vector<8x8xf32>, vector<8x8xf32>, vector<8x8xf32> -> vector<8x8xf32>
    %cst_42 = arith.constant dense<0xFF800000> : vector<8xf32>
    %95 = vector.multi_reduction <maximumf>, %94, %cst_42 [1] : vector<8x8xf32> to vector<8xf32>
    %96 = vector.shape_cast %95 : vector<8xf32> to vector<8x1xf32>
    %97 = vector.broadcast %96 : vector<8x1xf32> to vector<8x8xf32>
    %98 = arith.subf %94, %97 : vector<8x8xf32>
    %99 = math.exp %98 : vector<8x8xf32>
    %cst_43 = arith.constant dense<0.000000e+00> : vector<8xf32>
    %100 = vector.multi_reduction <add>, %99, %cst_43 [1] : vector<8x8xf32> to vector<8xf32>
    %101 = vector.shape_cast %100 : vector<8xf32> to vector<8x1xf32>
    %102 = tpu.reciprocal %101 {approx = true} : vector<8x1xf32> -> vector<8x1xf32>
    %103 = vector.broadcast %102 : vector<8x1xf32> to vector<8x8xf32>
    %104 = arith.mulf %99, %103 : vector<8x8xf32>
    %cst_44 = arith.constant dense<0.000000e+00> : vector<8x8xf32>
    %105 = tpu.matmul %104, %93, %cst_44 {dimension_numbers = #tpu.dot_dimension_numbers<[1], [0], [0], [1], [0, 0, 1, 1], [], []>} : vector<8x8xf32>, vector<8x8xf32>, vector<8x8xf32> -> vector<8x8xf32>
    %c8_45 = arith.constant 8 : index
    %c8_46 = arith.constant 8 : index
    %106 = vector.load %arg18[%c8_45, %c8_46] : memref<16x32xf32, #tpu.memory_space<vmem>>, vector<8x8xf32>
    tpu.vector_store %arg18[%c8_45, %c8_46], %105 {strides = array<i32>} : memref<16x32xf32, #tpu.memory_space<vmem>>, vector<8x8xf32>,
    %107 = vector.extract_strided_slice %10 {offsets = [8, 16], sizes = [8, 8], strides = [1, 1]} : vector<16x32xf32> to vector<8x8xf32>
    %108 = vector.extract_strided_slice %6 {offsets = [8, 16], sizes = [8, 8], strides = [1, 1]} : vector<16x32xf32> to vector<8x8xf32>
    %109 = vector.extract_strided_slice %4 {offsets = [8, 16], sizes = [8, 8], strides = [1, 1]} : vector<16x32xf32> to vector<8x8xf32>
    %cst_47 = arith.constant dense<0.000000e+00> : vector<8x8xf32>
    %110 = tpu.matmul %107, %108, %cst_47 {dimension_numbers = #tpu.dot_dimension_numbers<[1], [1], [0], [0], [0, 0, 1, 0], [], []>} : vector<8x8xf32>, vector<8x8xf32>, vector<8x8xf32> -> vector<8x8xf32>
    %cst_48 = arith.constant dense<0xFF800000> : vector<8xf32>
    %111 = vector.multi_reduction <maximumf>, %110, %cst_48 [1] : vector<8x8xf32> to vector<8xf32>
    %112 = vector.shape_cast %111 : vector<8xf32> to vector<8x1xf32>
    %113 = vector.broadcast %112 : vector<8x1xf32> to vector<8x8xf32>
    %114 = arith.subf %110, %113 : vector<8x8xf32>
    %115 = math.exp %114 : vector<8x8xf32>
    %cst_49 = arith.constant dense<0.000000e+00> : vector<8xf32>
    %116 = vector.multi_reduction <add>, %115, %cst_49 [1] : vector<8x8xf32> to vector<8xf32>
    %117 = vector.shape_cast %116 : vector<8xf32> to vector<8x1xf32>
    %118 = tpu.reciprocal %117 {approx = true} : vector<8x1xf32> -> vector<8x1xf32>
    %119 = vector.broadcast %118 : vector<8x1xf32> to vector<8x8xf32>
    %120 = arith.mulf %115, %119 : vector<8x8xf32>
    %cst_50 = arith.constant dense<0.000000e+00> : vector<8x8xf32>
    %121 = tpu.matmul %120, %109, %cst_50 {dimension_numbers = #tpu.dot_dimension_numbers<[1], [0], [0], [1], [0, 0, 1, 1], [], []>} : vector<8x8xf32>, vector<8x8xf32>, vector<8x8xf32> -> vector<8x8xf32>
    %c8_51 = arith.constant 8 : index
    %c16_52 = arith.constant 16 : index
    %122 = vector.load %arg18[%c8_51, %c16_52] : memref<16x32xf32, #tpu.memory_space<vmem>>, vector<8x8xf32>
    tpu.vector_store %arg18[%c8_51, %c16_52], %121 {strides = array<i32>} : memref<16x32xf32, #tpu.memory_space<vmem>>, vector<8x8xf32>,
    %123 = vector.extract_strided_slice %10 {offsets = [8, 24], sizes = [8, 8], strides = [1, 1]} : vector<16x32xf32> to vector<8x8xf32>
    %124 = vector.extract_strided_slice %6 {offsets = [8, 24], sizes = [8, 8], strides = [1, 1]} : vector<16x32xf32> to vector<8x8xf32>
    %125 = vector.extract_strided_slice %4 {offsets = [8, 24], sizes = [8, 8], strides = [1, 1]} : vector<16x32xf32> to vector<8x8xf32>
    %cst_53 = arith.constant dense<0.000000e+00> : vector<8x8xf32>
    %126 = tpu.matmul %123, %124, %cst_53 {dimension_numbers = #tpu.dot_dimension_numbers<[1], [1], [0], [0], [0, 0, 1, 0], [], []>} : vector<8x8xf32>, vector<8x8xf32>, vector<8x8xf32> -> vector<8x8xf32>
    %cst_54 = arith.constant dense<0xFF800000> : vector<8xf32>
    %127 = vector.multi_reduction <maximumf>, %126, %cst_54 [1] : vector<8x8xf32> to vector<8xf32>
    %128 = vector.shape_cast %127 : vector<8xf32> to vector<8x1xf32>
    %129 = vector.broadcast %128 : vector<8x1xf32> to vector<8x8xf32>
    %130 = arith.subf %126, %129 : vector<8x8xf32>
    %131 = math.exp %130 : vector<8x8xf32>
    %cst_55 = arith.constant dense<0.000000e+00> : vector<8xf32>
    %132 = vector.multi_reduction <add>, %131, %cst_55 [1] : vector<8x8xf32> to vector<8xf32>
    %133 = vector.shape_cast %132 : vector<8xf32> to vector<8x1xf32>
    %134 = tpu.reciprocal %133 {approx = true} : vector<8x1xf32> -> vector<8x1xf32>
    %135 = vector.broadcast %134 : vector<8x1xf32> to vector<8x8xf32>
    %136 = arith.mulf %131, %135 : vector<8x8xf32>
    %cst_56 = arith.constant dense<0.000000e+00> : vector<8x8xf32>
    %137 = tpu.matmul %136, %125, %cst_56 {dimension_numbers = #tpu.dot_dimension_numbers<[1], [0], [0], [1], [0, 0, 1, 1], [], []>} : vector<8x8xf32>, vector<8x8xf32>, vector<8x8xf32> -> vector<8x8xf32>
    %c8_57 = arith.constant 8 : index
    %c24_58 = arith.constant 24 : index
    %138 = vector.load %arg18[%c8_57, %c24_58] : memref<16x32xf32, #tpu.memory_space<vmem>>, vector<8x8xf32>
    tpu.vector_store %arg18[%c8_57, %c24_58], %137 {strides = array<i32>} : memref<16x32xf32, #tpu.memory_space<vmem>>, vector<8x8xf32>,
    %c0_59 = arith.constant 0 : index
    %c0_60 = arith.constant 0 : index
    %139 = vector.load %arg18[%c0_59, %c0_60] : memref<16x32xf32, #tpu.memory_space<vmem>>, vector<16x32xf32>
    %c0_61 = arith.constant 0 : index
    %c0_62 = arith.constant 0 : index
    %140 = vector.load %arg7[%c0_61, %c0_62] : memref<32x32xf32, #tpu.memory_space<vmem>>, vector<32x32xf32>
    %cst_63 = arith.constant dense<0.000000e+00> : vector<16x32xf32>
    %141 = tpu.matmul %139, %140, %cst_63 {dimension_numbers = #tpu.dot_dimension_numbers<[1], [0], [0], [1], [0, 0, 1, 1], [], []>} : vector<16x32xf32>, vector<32x32xf32>, vector<16x32xf32> -> vector<16x32xf32>
    %c0_64 = arith.constant 0 : index
    %c0_65 = arith.constant 0 : index
    %142 = vector.load %arg8[%c0_64, %c0_65] : memref<1x32xf32, #tpu.memory_space<vmem>>, vector<1x32xf32>
    %143 = vector.broadcast %142 : vector<1x32xf32> to vector<16x32xf32>
    %144 = arith.addf %141, %143 : vector<16x32xf32>
    %145 = arith.addf %144, %2 : vector<16x32xf32>
    %c0_66 = arith.constant 0 : index
    %c0_67 = arith.constant 0 : index
    %146 = vector.load %arg9[%c0_66, %c0_67] : memref<1x32xf32, #tpu.memory_space<vmem>>, vector<1x32xf32>
    %c0_68 = arith.constant 0 : index
    %c0_69 = arith.constant 0 : index
    %147 = vector.load %arg10[%c0_68, %c0_69] : memref<1x32xf32, #tpu.memory_space<vmem>>, vector<1x32xf32>
    %cst_70 = arith.constant dense<0.000000e+00> : vector<16xf32>
    %148 = vector.multi_reduction <add>, %145, %cst_70 [1] : vector<16x32xf32> to vector<16xf32>
    %149 = vector.shape_cast %148 : vector<16xf32> to vector<16x1xf32>
    %cst_71 = arith.constant 3.200000e+01 : f32
    %150 = vector.broadcast %cst_71 : f32 to vector<16x1xf32>
    %151 = arith.divf %149, %150 : vector<16x1xf32>
    %152 = vector.broadcast %151 : vector<16x1xf32> to vector<16x32xf32>
    %153 = arith.subf %145, %152 : vector<16x32xf32>
    %154 = arith.mulf %153, %153 : vector<16x32xf32>
    %cst_72 = arith.constant dense<0.000000e+00> : vector<16xf32>
    %155 = vector.multi_reduction <add>, %154, %cst_72 [1] : vector<16x32xf32> to vector<16xf32>
    %156 = vector.shape_cast %155 : vector<16xf32> to vector<16x1xf32>
    %cst_73 = arith.constant 3.200000e+01 : f32
    %157 = vector.broadcast %cst_73 : f32 to vector<16x1xf32>
    %158 = arith.divf %156, %157 : vector<16x1xf32>
    %159 = vector.broadcast %151 : vector<16x1xf32> to vector<16x32xf32>
    %160 = arith.subf %145, %159 : vector<16x32xf32>
    %cst_74 = arith.constant 9.99999974E-6 : f32
    %161 = vector.broadcast %cst_74 : f32 to vector<16x1xf32>
    %162 = arith.addf %158, %161 : vector<16x1xf32>
    %163 = math.rsqrt %162 : vector<16x1xf32>
    %164 = vector.broadcast %163 : vector<16x1xf32> to vector<16x32xf32>
    %165 = arith.mulf %160, %164 : vector<16x32xf32>
    %166 = vector.broadcast %146 : vector<1x32xf32> to vector<16x32xf32>
    %167 = arith.mulf %165, %166 : vector<16x32xf32>
    %168 = vector.broadcast %147 : vector<1x32xf32> to vector<16x32xf32>
    %169 = arith.addf %167, %168 : vector<16x32xf32>
    %c0_75 = arith.constant 0 : index
    %c0_76 = arith.constant 0 : index
    %170 = vector.load %arg11[%c0_75, %c0_76] : memref<32x128xf32, #tpu.memory_space<vmem>>, vector<32x128xf32>
    %cst_77 = arith.constant dense<0.000000e+00> : vector<16x128xf32>
    %171 = tpu.matmul %169, %170, %cst_77 {dimension_numbers = #tpu.dot_dimension_numbers<[1], [0], [0], [1], [0, 0, 1, 1], [], []>} : vector<16x32xf32>, vector<32x128xf32>, vector<16x128xf32> -> vector<16x128xf32>
    %c0_78 = arith.constant 0 : index
    %c0_79 = arith.constant 0 : index
    %172 = vector.load %arg12[%c0_78, %c0_79] : memref<1x128xf32, #tpu.memory_space<vmem>>, vector<1x128xf32>
    %173 = vector.broadcast %172 : vector<1x128xf32> to vector<16x128xf32>
    %174 = arith.addf %171, %173 : vector<16x128xf32>
    %cst_80 = arith.constant 0.000000e+00 : f32
    %175 = vector.broadcast %cst_80 : f32 to vector<16x128xf32>
    %176 = arith.maximumf %174, %175 : vector<16x128xf32>
    %c0_81 = arith.constant 0 : index
    %c0_82 = arith.constant 0 : index
    %177 = vector.load %arg13[%c0_81, %c0_82] : memref<128x32xf32, #tpu.memory_space<vmem>>, vector<128x32xf32>
    %cst_83 = arith.constant dense<0.000000e+00> : vector<16x32xf32>
    %178 = tpu.matmul %176, %177, %cst_83 {dimension_numbers = #tpu.dot_dimension_numbers<[1], [0], [0], [1], [0, 0, 1, 1], [], []>} : vector<16x128xf32>, vector<128x32xf32>, vector<16x32xf32> -> vector<16x32xf32>
    %c0_84 = arith.constant 0 : index
    %c0_85 = arith.constant 0 : index
    %179 = vector.load %arg14[%c0_84, %c0_85] : memref<1x32xf32, #tpu.memory_space<vmem>>, vector<1x32xf32>
    %180 = vector.broadcast %179 : vector<1x32xf32> to vector<16x32xf32>
    %181 = arith.addf %178, %180 : vector<16x32xf32>
    %182 = arith.addf %181, %169 : vector<16x32xf32>
    %c0_86 = arith.constant 0 : index
    %c0_87 = arith.constant 0 : index
    %183 = vector.load %arg15[%c0_86, %c0_87] : memref<1x32xf32, #tpu.memory_space<vmem>>, vector<1x32xf32>
    %c0_88 = arith.constant 0 : index
    %c0_89 = arith.constant 0 : index
    %184 = vector.load %arg16[%c0_88, %c0_89] : memref<1x32xf32, #tpu.memory_space<vmem>>, vector<1x32xf32>
    %cst_90 = arith.constant dense<0.000000e+00> : vector<16xf32>
    %185 = vector.multi_reduction <add>, %182, %cst_90 [1] : vector<16x32xf32> to vector<16xf32>
    %186 = vector.shape_cast %185 : vector<16xf32> to vector<16x1xf32>
    %cst_91 = arith.constant 3.200000e+01 : f32
    %187 = vector.broadcast %cst_91 : f32 to vector<16x1xf32>
    %188 = arith.divf %186, %187 : vector<16x1xf32>
    %189 = vector.broadcast %188 : vector<16x1xf32> to vector<16x32xf32>
    %190 = arith.subf %182, %189 : vector<16x32xf32>
    %191 = arith.mulf %190, %190 : vector<16x32xf32>
    %cst_92 = arith.constant dense<0.000000e+00> : vector<16xf32>
    %192 = vector.multi_reduction <add>, %191, %cst_92 [1] : vector<16x32xf32> to vector<16xf32>
    %193 = vector.shape_cast %192 : vector<16xf32> to vector<16x1xf32>
    %cst_93 = arith.constant 3.200000e+01 : f32
    %194 = vector.broadcast %cst_93 : f32 to vector<16x1xf32>
    %195 = arith.divf %193, %194 : vector<16x1xf32>
    %196 = vector.broadcast %188 : vector<16x1xf32> to vector<16x32xf32>
    %197 = arith.subf %182, %196 : vector<16x32xf32>
    %cst_94 = arith.constant 9.99999974E-6 : f32
    %198 = vector.broadcast %cst_94 : f32 to vector<16x1xf32>
    %199 = arith.addf %195, %198 : vector<16x1xf32>
    %200 = math.rsqrt %199 : vector<16x1xf32>
    %201 = vector.broadcast %200 : vector<16x1xf32> to vector<16x32xf32>
    %202 = arith.mulf %197, %201 : vector<16x32xf32>
    %203 = vector.broadcast %183 : vector<1x32xf32> to vector<16x32xf32>
    %204 = arith.mulf %202, %203 : vector<16x32xf32>
    %205 = vector.broadcast %184 : vector<1x32xf32> to vector<16x32xf32>
    %206 = arith.addf %204, %205 : vector<16x32xf32>
    %c0_95 = arith.constant 0 : index
    %c0_96 = arith.constant 0 : index
    %207 = vector.load %arg17[%c0_95, %c0_96] : memref<16x32xf32, #tpu.memory_space<vmem>>, vector<16x32xf32>
    tpu.vector_store %arg17[%c0_95, %c0_96], %206 {strides = array<i32>} : memref<16x32xf32, #tpu.memory_space<vmem>>, vector<16x32xf32>,
    return
  }
  func.func @transform_0(%arg0: i32) -> (i32, i32) {
    %c0_i32 = arith.constant 0 : i32
    %c0_i32_0 = arith.constant 0 : i32
    return %arg0, %c0_i32 : i32, i32
  }
  func.func @transform_1(%arg0: i32) -> (i32, i32) {
    %c0_i32 = arith.constant 0 : i32
    %c0_i32_0 = arith.constant 0 : i32
    return %arg0, %c0_i32 : i32, i32
  }
  func.func @transform_2(%arg0: i32) -> (i32, i32) {
    %c0_i32 = arith.constant 0 : i32
    %c0_i32_0 = arith.constant 0 : i32
    return %arg0, %c0_i32 : i32, i32
  }
  func.func @transform_3(%arg0: i32) -> (i32, i32) {
    %c0_i32 = arith.constant 0 : i32
    %c0_i32_0 = arith.constant 0 : i32
    %c0_i32_1 = arith.constant 0 : i32
    return %c0_i32, %c0_i32_0 : i32, i32
  }
  func.func @transform_4(%arg0: i32) -> (i32, i32) {
    %c0_i32 = arith.constant 0 : i32
    %c0_i32_0 = arith.constant 0 : i32
    %c0_i32_1 = arith.constant 0 : i32
    return %c0_i32, %c0_i32_0 : i32, i32
  }
  func.func @transform_5(%arg0: i32) -> (i32, i32) {
    %c0_i32 = arith.constant 0 : i32
    %c0_i32_0 = arith.constant 0 : i32
    %c0_i32_1 = arith.constant 0 : i32
    return %c0_i32, %c0_i32_0 : i32, i32
  }
  func.func @transform_6(%arg0: i32) -> (i32, i32) {
    %c0_i32 = arith.constant 0 : i32
    %c0_i32_0 = arith.constant 0 : i32
    %c0_i32_1 = arith.constant 0 : i32
    return %c0_i32, %c0_i32_0 : i32, i32
  }
  func.func @transform_7(%arg0: i32) -> (i32, i32) {
    %c0_i32 = arith.constant 0 : i32
    %c0_i32_0 = arith.constant 0 : i32
    %c0_i32_1 = arith.constant 0 : i32
    return %c0_i32, %c0_i32_0 : i32, i32
  }
  func.func @transform_8(%arg0: i32) -> (i32, i32) {
    %c0_i32 = arith.constant 0 : i32
    %c0_i32_0 = arith.constant 0 : i32
    %c0_i32_1 = arith.constant 0 : i32
    return %c0_i32, %c0_i32_0 : i32, i32
  }
  func.func @transform_9(%arg0: i32) -> (i32, i32) {
    %c0_i32 = arith.constant 0 : i32
    %c0_i32_0 = arith.constant 0 : i32
    %c0_i32_1 = arith.constant 0 : i32
    return %c0_i32, %c0_i32_0 : i32, i32
  }
  func.func @transform_10(%arg0: i32) -> (i32, i32) {
    %c0_i32 = arith.constant 0 : i32
    %c0_i32_0 = arith.constant 0 : i32
    %c0_i32_1 = arith.constant 0 : i32
    return %c0_i32, %c0_i32_0 : i32, i32
  }
  func.func @transform_11(%arg0: i32) -> (i32, i32) {
    %c0_i32 = arith.constant 0 : i32
    %c0_i32_0 = arith.constant 0 : i32
    %c0_i32_1 = arith.constant 0 : i32
    return %c0_i32, %c0_i32_0 : i32, i32
  }
  func.func @transform_12(%arg0: i32) -> (i32, i32) {
    %c0_i32 = arith.constant 0 : i32
    %c0_i32_0 = arith.constant 0 : i32
    %c0_i32_1 = arith.constant 0 : i32
    return %c0_i32, %c0_i32_0 : i32, i32
  }
  func.func @transform_13(%arg0: i32) -> (i32, i32) {
    %c0_i32 = arith.constant 0 : i32
    %c0_i32_0 = arith.constant 0 : i32
    %c0_i32_1 = arith.constant 0 : i32
    return %c0_i32, %c0_i32_0 : i32, i32
  }
  func.func @transform_14(%arg0: i32) -> (i32, i32) {
    %c0_i32 = arith.constant 0 : i32
    %c0_i32_0 = arith.constant 0 : i32
    %c0_i32_1 = arith.constant 0 : i32
    return %c0_i32, %c0_i32_0 : i32, i32
  }
  func.func @transform_15(%arg0: i32) -> (i32, i32) {
    %c0_i32 = arith.constant 0 : i32
    %c0_i32_0 = arith.constant 0 : i32
    %c0_i32_1 = arith.constant 0 : i32
    return %c0_i32, %c0_i32_0 : i32, i32
  }
  func.func @transform_16(%arg0: i32) -> (i32, i32) {
    %c0_i32 = arith.constant 0 : i32
    %c0_i32_0 = arith.constant 0 : i32
    return %arg0, %c0_i32 : i32, i32
  }
}

</mosaic_0001>

<llo_original>
// kernel: tpu_custom_call.1
$region0: #{tpu_custom_call.1}
  #allocation0 [shape = 'u32[]', space=smem, size = 0x4, offset = 0x4, fixed_abs, tag = 'smem constant byte address 0x4 - core index']
  #allocation1 [shape = 'u32[72,128]{1,0:T(1,128)}', space=vmem, size = 0x9000, scoped, tag = 'internal scratch']
  #allocation2 [shape = 'f32[16,32]{1,0:T(8,128)}', space=vmem, size = 0x2000, scoped, tag = 'scratch operand']
  %s0 = inlined_call_operand.hbm [shape: f32[16,32], index: 0, kind: input, shape index: {}]
  %s1 = inlined_call_operand.hbm [shape: f32[16,32], index: 1, kind: input, shape index: {}]
  %s2 = inlined_call_operand.hbm [shape: f32[16,32], index: 2, kind: input, shape index: {}]
  %s3 = inlined_call_operand.vmem [shape: f32[32,32], index: 3, kind: input, shape index: {}]
  %s4 = inlined_call_operand.vmem [shape: f32[32,32], index: 4, kind: input, shape index: {}]
  %s5 = inlined_call_operand.vmem [shape: f32[32,32], index: 5, kind: input, shape index: {}]
  %s6 = inlined_call_operand.vmem [shape: f32[32,32], index: 6, kind: input, shape index: {}]
  %s7 = inlined_call_operand.vmem [shape: f32[1,32], index: 7, kind: input, shape index: {}]
  %s8 = inlined_call_operand.vmem [shape: f32[1,32], index: 8, kind: input, shape index: {}]
  %s9 = inlined_call_operand.vmem [shape: f32[1,32], index: 9, kind: input, shape index: {}]
  %s10 = inlined_call_operand.vmem [shape: f32[32,128], index: 10, kind: input, shape index: {}]
  %s11 = inlined_call_operand.vmem [shape: f32[1,128], index: 11, kind: input, shape index: {}]
  %s12 = inlined_call_operand.vmem [shape: f32[128,32], index: 12, kind: input, shape index: {}]
  %s13 = inlined_call_operand.vmem [shape: f32[1,32], index: 13, kind: input, shape index: {}]
  %s14 = inlined_call_operand.vmem [shape: f32[1,32], index: 14, kind: input, shape index: {}]
  %s15 = inlined_call_operand.vmem [shape: f32[1,32], index: 15, kind: input, shape index: {}]
  %s16 = inlined_call_operand.hbm [shape: f32[16,32], index: 16, kind: output, shape index: {}]
  %s17 = sld [smem:[#allocation0]]
  $region86: #{tpu_custom_call.1} parent=0
    _
  %s19 = ssub.s32 1, %s17
  %s20 = scalar_select 0, %s19, %s17
  $region1: #{tpu_custom_call.1} parent=0
    #allocation3 [shape = 'u8[8192]{0}', space=vmem, size = 0x2000, scoped, tag = 'input window, operand 0, single buffered']
    #allocation4 [shape = 's32[1]{0}', space=sflag, size = 0x4, scoped, tag = 'scoped memory for tpu_custom_call.1']
    #allocation5 [shape = 's32[1]{0}', space=sflag, size = 0x4, scoped, tag = 'scoped memory for tpu_custom_call.1']
    #allocation6 [shape = 'u8[8192]{0}', space=vmem, size = 0x2000, scoped, tag = 'input window, operand 1, single buffered']
    #allocation7 [shape = 's32[1]{0}', space=sflag, size = 0x4, scoped, tag = 'scoped memory for tpu_custom_call.1']
    #allocation8 [shape = 'u8[8192]{0}', space=vmem, size = 0x2000, scoped, tag = 'input window, operand 2, single buffered']
    #allocation9 [shape = 'u8[8192]{0}', space=vmem, size = 0x2000, scoped, tag = 'output window, operand 0, single buffered']
    %21 = vsyncpa [#allocation4], 0
    %22 = vsyncpa [#allocation7], 0
    %23 = vsyncpa [#allocation5], 0
    // Predicated region
    $region2: #{tpu_custom_call.1} parent=1 // pred_check
      _
    $region3: #{tpu_custom_call.1} parent=1 // pred_check_branch
      %25 = sbr.rel (0) target = $region5
    $region4: #{tpu_custom_call.1} parent=1 // pred_region
      %27 = vsyncadd [#allocation4], 0
      %s28 = sshll.u32 %s0, 4
      %s29 = int_to_ptr.hbm [resolvable:$true] %s28
      %s30 = sshll.u32 [#allocation3], 4
      %s31 = int_to_ptr.vmem [resolvable:$true] %s30
      %36 = dma.hbm_to_vmem [thread:$0]  %s29, 256, %s31, [#allocation4], 128, 128, 8
    $region5: #{tpu_custom_call.1} parent=1 // pred_fallthru
      _
    // Predicated region
    $region6: #{tpu_custom_call.1} parent=1 // pred_check
      _
    $region7: #{tpu_custom_call.1} parent=1 // pred_check_branch
      %38 = sbr.rel (0) target = $region9
    $region8: #{tpu_custom_call.1} parent=1 // pred_region
      %40 = vsyncadd [#allocation7], 0
      %s41 = sshll.u32 %s1, 4
      %s42 = int_to_ptr.hbm [resolvable:$true] %s41
      %s43 = sshll.u32 [#allocation6], 4
      %s44 = int_to_ptr.vmem [resolvable:$true] %s43
      %49 = dma.hbm_to_vmem [thread:$0]  %s42, 256, %s44, [#allocation7], 128, 128, 8
    $region9: #{tpu_custom_call.1} parent=1 // pred_fallthru
      _
    // Predicated region
    $region10: #{tpu_custom_call.1} parent=1 // pred_check
      _
    $region11: #{tpu_custom_call.1} parent=1 // pred_check_branch
      %51 = sbr.rel (0) target = $region13
    $region12: #{tpu_custom_call.1} parent=1 // pred_region
      %53 = vsyncadd [#allocation7], 0
      %s54 = sshll.u32 %s2, 4
      %s55 = int_to_ptr.hbm [resolvable:$true] %s54
      %s56 = sshll.u32 [#allocation8], 4
      %s57 = int_to_ptr.vmem [resolvable:$true] %s56
      %62 = dma.hbm_to_vmem [thread:$0]  %s55, 256, %s57, [#allocation7], 128, 128, 8
    $region13: #{tpu_custom_call.1} parent=1 // pred_fallthru
      _
    // Predicated region
    $region14: #{tpu_custom_call.1} parent=1 // pred_check
      _
    $region15: #{tpu_custom_call.1} parent=1 // pred_check_branch
      %64 = sbr.rel (0) target = $region17
    $region16: #{tpu_custom_call.1} parent=1 // pred_region
      _
    $region17: #{tpu_custom_call.1} parent=1 // pred_fallthru
      _
    // Predicated region
    $region18: #{tpu_custom_call.1} parent=1 // pred_check
      _
    $region19: #{tpu_custom_call.1} parent=1 // pred_check_branch
      %66 = sbr.rel (0) target = $region21
    $region20: #{tpu_custom_call.1} parent=1 // pred_region
      _
    $region21: #{tpu_custom_call.1} parent=1 // pred_fallthru
      _
    // Predicated region
    $region22: #{tpu_custom_call.1} parent=1 // pred_check
      _
    $region23: #{tpu_custom_call.1} parent=1 // pred_check_branch
      %68 = sbr.rel (0) target = $region25
    $region24: #{tpu_custom_call.1} parent=1 // pred_region
      _
    $region25: #{tpu_custom_call.1} parent=1 // pred_fallthru
      _
    // Predicated region
    $region26: #{tpu_custom_call.1} parent=1 // pred_check
      _
    $region27: #{tpu_custom_call.1} parent=1 // pred_check_branch
      %70 = sbr.rel (0) target = $region29
    $region28: #{tpu_custom_call.1} parent=1 // pred_region
      _
    $region29: #{tpu_custom_call.1} parent=1 // pred_fallthru
      _
    // Predicated region
    $region30: #{tpu_custom_call.1} parent=1 // pred_check
      _
    $region31: #{tpu_custom_call.1} parent=1 // pred_check_branch
      %72 = sbr.rel (0) target = $region33
    $region32: #{tpu_custom_call.1} parent=1 // pred_region
      _
    $region33: #{tpu_custom_call.1} parent=1 // pred_fallthru
      _
    // Predicated region
    $region34: #{tpu_custom_call.1} parent=1 // pred_check
      _
    $region35: #{tpu_custom_call.1} parent=1 // pred_check_branch
      %74 = sbr.rel (0) target = $region37
    $region36: #{tpu_custom_call.1} parent=1 // pred_region
      _
    $region37: #{tpu_custom_call.1} parent=1 // pred_fallthru
      _
    // Predicated region
    $region38: #{tpu_custom_call.1} parent=1 // pred_check
      _
    $region39: #{tpu_custom_call.1} parent=1 // pred_check_branch
      %76 = sbr.rel (0) target = $region41
    $region40: #{tpu_custom_call.1} parent=1 // pred_region
      _
    $region41: #{tpu_custom_call.1} parent=1 // pred_fallthru
      _
    // Predicated region
    $region42: #{tpu_custom_call.1} parent=1 // pred_check
      _
    $region43: #{tpu_custom_call.1} parent=1 // pred_check_branch
      %78 = sbr.rel (0) target = $region45
    $region44: #{tpu_custom_call.1} parent=1 // pred_region
      _
    $region45: #{tpu_custom_call.1} parent=1 // pred_fallthru
      _
    // Predicated region
    $region46: #{tpu_custom_call.1} parent=1 // pred_check
      _
    $region47: #{tpu_custom_call.1} parent=1 // pred_check_branch
      %80 = sbr.rel (0) target = $region49
    $region48: #{tpu_custom_call.1} parent=1 // pred_region
      _
    $region49: #{tpu_custom_call.1} parent=1 // pred_fallthru
      _
    // Predicated region
    $region50: #{tpu_custom_call.1} parent=1 // pred_check
      _
    $region51: #{tpu_custom_call.1} parent=1 // pred_check_branch
      %82 = sbr.rel (0) target = $region53
    $region52: #{tpu_custom_call.1} parent=1 // pred_region
      _
    $region53: #{tpu_custom_call.1} parent=1 // pred_fallthru
      _
    // Predicated region
    $region54: #{tpu_custom_call.1} parent=1 // pred_check
      _
    $region55: #{tpu_custom_call.1} parent=1 // pred_check_branch
      %84 = sbr.rel (0) target = $region57
    $region56: #{tpu_custom_call.1} parent=1 // pred_region
      _
    $region57: #{tpu_custom_call.1} parent=1 // pred_fallthru
      _
    // Predicated region
    $region58: #{tpu_custom_call.1} parent=1 // pred_check
      _
    $region59: #{tpu_custom_call.1} parent=1 // pred_check_branch
      %86 = sbr.rel (0) target = $region61
    $region60: #{tpu_custom_call.1} parent=1 // pred_region
      _
    $region61: #{tpu_custom_call.1} parent=1 // pred_fallthru
      _
    // Predicated region
    $region62: #{tpu_custom_call.1} parent=1 // pred_check
      _
    $region63: #{tpu_custom_call.1} parent=1 // pred_check_branch
      %88 = sbr.rel (0) target = $region65
    $region64: #{tpu_custom_call.1} parent=1 // pred_region
      _
    $region65: #{tpu_custom_call.1} parent=1 // pred_fallthru
      _
    // Predicated region
    $region66: #{tpu_custom_call.1} parent=1 // pred_check
      _
    $region67: #{tpu_custom_call.1} parent=1 // pred_check_branch
      %90 = sbr.rel (0) target = $region69
    $region68: #{tpu_custom_call.1} parent=1 // pred_region
      %92 = dma.done [#allocation4], 256
    $region69: #{tpu_custom_call.1} parent=1 // pred_fallthru
      _
    // Predicated region
    $region70: #{tpu_custom_call.1} parent=1 // pred_check
      _
    $region71: #{tpu_custom_call.1} parent=1 // pred_check_branch
      %94 = sbr.rel (0) target = $region73
    $region72: #{tpu_custom_call.1} parent=1 // pred_region
      %96 = dma.done [#allocation7], 256
    $region73: #{tpu_custom_call.1} parent=1 // pred_fallthru
      _
    // Predicated region
    $region74: #{tpu_custom_call.1} parent=1 // pred_check
      _
    $region75: #{tpu_custom_call.1} parent=1 // pred_check_branch
      %98 = sbr.rel (0) target = $region77
    $region76: #{tpu_custom_call.1} parent=1 // pred_region
      %100 = dma.done [#allocation7], 256
    $region77: #{tpu_custom_call.1} parent=1 // pred_fallthru
      _
    %v101 = vld [vmem:[#allocation3] sm:$0xff]
    %v102 = vld [vmem:[#allocation3 + $0x8] sm:$0xff]
    %v103 = vld [vmem:[#allocation6] sm:$0xff]
    %v104 = vld [vmem:[#allocation6 + $0x8] sm:$0xff]
    %v105 = vld [vmem:[#allocation8] sm:$0xff]
    %v106 = vld [vmem:[#allocation8 + $0x8] sm:$0xff]
    %v107 = vld [vmem:[%s3] sm:$0xff]
    %v108 = vld [vmem:[%s3 + $0x8] sm:$0xff]
    %v109 = vld [vmem:[%s3 + $0x10] sm:$0xff]
    %v110 = vld [vmem:[%s3 + $0x18] sm:$0xff]
    %vm111 = vcmask 261120
    %v113 = vsel %vm111, %v101, 0
    %v116 = vsel %vm111, %v102, 0
    %118 = vmatpush.msra.mxu0 0.0
    %119 = vmatpush.msra.mxu0 0.0
    %120 = vmatpush.msra.mxu0 0.0
    %121 = vmatpush.msra.mxu0 0.0
    %122 = vmatpush.msra.mxu0 0.0
    %123 = vmatpush.msra.mxu0 0.0
    %124 = vmatpush.msra.mxu0 0.0
    %125 = vmatpush.msra.mxu0 0.0
    %126 = vmatpush.msra.mxu0 0.0
    %127 = vmatpush.msra.mxu0 0.0
    %128 = vmatpush.msra.mxu0 0.0
    %129 = vmatpush.msra.mxu0 0.0
    %130 = vmatpush.msra.mxu0 %v110
    %131 = vmatpush.msra.mxu0 %v109
    %132 = vmatpush.msra.mxu0 %v108
    %133 = vmatpush.msra.mxu0 %v107
    %134 = vmatmul.f32.gmra.mxu0 %v113
    %v135 = vpop.f32.mrf.mxu0
    %v136 = vadd.f32 0.0, %v135
    %137 = vmatmul.f32.gmra.mxu0 %v116
    %v138 = vpop.f32.mrf.mxu0
    %v139 = vadd.f32 0.0, %v138
    %140 = vdwg.mxu0
    %v141 = vld [vmem:[%s4] sm:$0xff]
    %v142 = vld [vmem:[%s4 + $0x8] sm:$0xff]
    %v143 = vld [vmem:[%s4 + $0x10] sm:$0xff]
    %v144 = vld [vmem:[%s4 + $0x18] sm:$0xff]
    %v146 = vsel %vm111, %v103, 0
    %v149 = vsel %vm111, %v104, 0
    %151 = vmatpush.msra.mxu0 0.0
    %152 = vmatpush.msra.mxu0 0.0
    %153 = vmatpush.msra.mxu0 0.0
    %154 = vmatpush.msra.mxu0 0.0
    %155 = vmatpush.msra.mxu0 0.0
    %156 = vmatpush.msra.mxu0 0.0
    %157 = vmatpush.msra.mxu0 0.0
    %158 = vmatpush.msra.mxu0 0.0
    %159 = vmatpush.msra.mxu0 0.0
    %160 = vmatpush.msra.mxu0 0.0
    %161 = vmatpush.msra.mxu0 0.0
    %162 = vmatpush.msra.mxu0 0.0
    %163 = vmatpush.msra.mxu0 %v144
    %164 = vmatpush.msra.mxu0 %v143
    %165 = vmatpush.msra.mxu0 %v142
    %166 = vmatpush.msra.mxu0 %v141
    %167 = vmatmul.f32.gmra.mxu0 %v146
    %v168 = vpop.f32.mrf.mxu0
    %v169 = vadd.f32 0.0, %v168
    %170 = vmatmul.f32.gmra.mxu0 %v149
    %v171 = vpop.f32.mrf.mxu0
    %v172 = vadd.f32 0.0, %v171
    %173 = vdwg.mxu0
    %v174 = vld [vmem:[%s5] sm:$0xff]
    %v175 = vld [vmem:[%s5 + $0x8] sm:$0xff]
    %v176 = vld [vmem:[%s5 + $0x10] sm:$0xff]
    %v177 = vld [vmem:[%s5 + $0x18] sm:$0xff]
    %v179 = vsel %vm111, %v105, 0
    %v182 = vsel %vm111, %v106, 0
    %184 = vmatpush.msra.mxu0 0.0
    %185 = vmatpush.msra.mxu0 0.0
    %186 = vmatpush.msra.mxu0 0.0
    %187 = vmatpush.msra.mxu0 0.0
    %188 = vmatpush.msra.mxu0 0.0
    %189 = vmatpush.msra.mxu0 0.0
    %190 = vmatpush.msra.mxu0 0.0
    %191 = vmatpush.msra.mxu0 0.0
    %192 = vmatpush.msra.mxu0 0.0
    %193 = vmatpush.msra.mxu0 0.0
    %194 = vmatpush.msra.mxu0 0.0
    %195 = vmatpush.msra.mxu0 0.0
    %196 = vmatpush.msra.mxu0 %v177
    %197 = vmatpush.msra.mxu0 %v176
    %198 = vmatpush.msra.mxu0 %v175
    %199 = vmatpush.msra.mxu0 %v174
    %200 = vmatmul.f32.gmra.mxu0 %v179
    %v201 = vpop.f32.mrf.mxu0
    %v202 = vadd.f32 0.0, %v201
    %203 = vmatmul.f32.gmra.mxu0 %v182
    %v204 = vpop.f32.mrf.mxu0
    %v205 = vadd.f32 0.0, %v204
    %206 = vdwg.mxu0
    %v207 = vmul.f32 %v202, 0.17677669
    %v208 = vmul.f32 %v205, 0.17677669
    %vm209 = vcmask 64512
    %v211 = vsel %vm209, %v207, 0
    %v214 = vsel %vm209, %v169, 0
    %216 = vmatpush.xpose.msra.mxu0 0.0
    %217 = vmatpush.xpose.msra.mxu0 0.0
    %218 = vmatpush.xpose.msra.mxu0 0.0
    %219 = vmatpush.xpose.msra.mxu0 0.0
    %220 = vmatpush.xpose.msra.mxu0 0.0
    %221 = vmatpush.xpose.msra.mxu0 0.0
    %222 = vmatpush.xpose.msra.mxu0 0.0
    %223 = vmatpush.xpose.msra.mxu0 0.0
    %224 = vmatpush.xpose.msra.mxu0 0.0
    %225 = vmatpush.xpose.msra.mxu0 0.0
    %226 = vmatpush.xpose.msra.mxu0 0.0
    %227 = vmatpush.xpose.msra.mxu0 0.0
    %228 = vmatpush.xpose.msra.mxu0 0.0
    %229 = vmatpush.xpose.msra.mxu0 0.0
    %230 = vmatpush.xpose.msra.mxu0 0.0
    %231 = vmatpush.xpose.msra.mxu0 %v214
    %232 = vmatmul.f32.gmra.mxu0 %v211
    %v233 = vpop.f32.mrf.mxu0
    %v234 = vadd.f32 0.0, %v233
    %235 = vdwg.mxu0
    %v236 = vsel %vm209, %v234, -inf
    %237 = vmax.xlane.f32.xlu0 %v236
    %v238 = vpop.xlane.xlu0 %237
    %v239 = vsub.f32 %v234, %v238
    %v240 = vmul.f32 %v239, 1.442695
    %v241 = vpow.pop %v240
    %v242 = vsel %vm209, %v241, 0.0
    %243 = vadd.xlane.f32.xlu0 %v242
    %v244 = vpop.xlane.xlu0 %243
    %v245 = vrcp.pop %v244
    %v246 = vmul.f32 %v241, %v245
    %v248 = vsel %vm209, %v246, 0
    %250 = vmatpush.msra.mxu0 0.0
    %251 = vmatpush.msra.mxu0 0.0
    %252 = vmatpush.msra.mxu0 0.0
    %253 = vmatpush.msra.mxu0 0.0
    %254 = vmatpush.msra.mxu0 0.0
    %255 = vmatpush.msra.mxu0 0.0
    %256 = vmatpush.msra.mxu0 0.0
    %257 = vmatpush.msra.mxu0 0.0
    %258 = vmatpush.msra.mxu0 0.0
    %259 = vmatpush.msra.mxu0 0.0
    %260 = vmatpush.msra.mxu0 0.0
    %261 = vmatpush.msra.mxu0 0.0
    %262 = vmatpush.msra.mxu0 0.0
    %263 = vmatpush.msra.mxu0 0.0
    %264 = vmatpush.msra.mxu0 0.0
    %265 = vmatpush.msra.mxu0 %v136
    %266 = vmatmul.f32.gmra.mxu0 %v248
    %v267 = vpop.f32.mrf.mxu0
    %v268 = vadd.f32 0.0, %v267
    %269 = vdwg.mxu0
    %270 = vst.msk [vmem:[#allocation2] sm:$0xff] %vm209, %v268
    %271 = vrot.lane.b32.xlu0 %v207, 120
    %v272 = vpop.permute.xlu0 %271
    %273 = vrot.lane.b32.xlu0 %v169, 120
    %v274 = vpop.permute.xlu0 %273
    %v275 = vsel %vm209, %v272, 0
    %v277 = vsel %vm209, %v274, 0
    %279 = vmatpush.xpose.msra.mxu0 0.0
    %280 = vmatpush.xpose.msra.mxu0 0.0
    %281 = vmatpush.xpose.msra.mxu0 0.0
    %282 = vmatpush.xpose.msra.mxu0 0.0
    %283 = vmatpush.xpose.msra.mxu0 0.0
    %284 = vmatpush.xpose.msra.mxu0 0.0
    %285 = vmatpush.xpose.msra.mxu0 0.0
    %286 = vmatpush.xpose.msra.mxu0 0.0
    %287 = vmatpush.xpose.msra.mxu0 0.0
    %288 = vmatpush.xpose.msra.mxu0 0.0
    %289 = vmatpush.xpose.msra.mxu0 0.0
    %290 = vmatpush.xpose.msra.mxu0 0.0
    %291 = vmatpush.xpose.msra.mxu0 0.0
    %292 = vmatpush.xpose.msra.mxu0 0.0
    %293 = vmatpush.xpose.msra.mxu0 0.0
    %294 = vmatpush.xpose.msra.mxu0 %v277
    %295 = vmatmul.f32.gmra.mxu0 %v275
    %v296 = vpop.f32.mrf.mxu0
    %v297 = vadd.f32 0.0, %v296
    %298 = vdwg.mxu0
    %v299 = vsel %vm209, %v297, -inf
    %300 = vmax.xlane.f32.xlu0 %v299
    %v301 = vpop.xlane.xlu0 %300
    %v302 = vsub.f32 %v297, %v301
    %v303 = vmul.f32 %v302, 1.442695
    %v304 = vpow.pop %v303
    %v305 = vsel %vm209, %v304, 0.0
    %306 = vadd.xlane.f32.xlu0 %v305
    %v307 = vpop.xlane.xlu0 %306
    %v308 = vrcp.pop %v307
    %v309 = vmul.f32 %v304, %v308
    %311 = vrot.lane.b32.xlu0 %v136, 120
    %v312 = vpop.permute.xlu0 %311
    %v315 = vsel %vm209, %v309, 0
    %317 = vmatpush.msra.mxu0 0.0
    %318 = vmatpush.msra.mxu0 0.0
    %319 = vmatpush.msra.mxu0 0.0
    %320 = vmatpush.msra.mxu0 0.0
    %321 = vmatpush.msra.mxu0 0.0
    %322 = vmatpush.msra.mxu0 0.0
    %323 = vmatpush.msra.mxu0 0.0
    %324 = vmatpush.msra.mxu0 0.0
    %325 = vmatpush.msra.mxu0 0.0
    %326 = vmatpush.msra.mxu0 0.0
    %327 = vmatpush.msra.mxu0 0.0
    %328 = vmatpush.msra.mxu0 0.0
    %329 = vmatpush.msra.mxu0 0.0
    %330 = vmatpush.msra.mxu0 0.0
    %331 = vmatpush.msra.mxu0 0.0
    %332 = vmatpush.msra.mxu0 %v312
    %333 = vmatmul.f32.gmra.mxu0 %v315
    %v334 = vpop.f32.mrf.mxu0
    %v335 = vadd.f32 0.0, %v334
    %336 = vdwg.mxu0
    %338 = vrot.lane.b32.xlu0 %v335, 8
    %v339 = vpop.permute.xlu0 %338
    %vm341 = vcmask 130112
    %342 = vst.msk [vmem:[#allocation2] sm:$0xff] %vm341, %v339
    %343 = vrot.lane.b32.xlu0 %v207, 112
    %v344 = vpop.permute.xlu0 %343
    %345 = vrot.lane.b32.xlu0 %v169, 112
    %v346 = vpop.permute.xlu0 %345
    %v347 = vsel %vm209, %v344, 0
    %v349 = vsel %vm209, %v346, 0
    %351 = vmatpush.xpose.msra.mxu0 0.0
    %352 = vmatpush.xpose.msra.mxu0 0.0
    %353 = vmatpush.xpose.msra.mxu0 0.0
    %354 = vmatpush.xpose.msra.mxu0 0.0
    %355 = vmatpush.xpose.msra.mxu0 0.0
    %356 = vmatpush.xpose.msra.mxu0 0.0
    %357 = vmatpush.xpose.msra.mxu0 0.0
    %358 = vmatpush.xpose.msra.mxu0 0.0
    %359 = vmatpush.xpose.msra.mxu0 0.0
    %360 = vmatpush.xpose.msra.mxu0 0.0
    %361 = vmatpush.xpose.msra.mxu0 0.0
    %362 = vmatpush.xpose.msra.mxu0 0.0
    %363 = vmatpush.xpose.msra.mxu0 0.0
    %364 = vmatpush.xpose.msra.mxu0 0.0
    %365 = vmatpush.xpose.msra.mxu0 0.0
    %366 = vmatpush.xpose.msra.mxu0 %v349
    %367 = vmatmul.f32.gmra.mxu0 %v347
    %v368 = vpop.f32.mrf.mxu0
    %v369 = vadd.f32 0.0, %v368
    %370 = vdwg.mxu0
    %v371 = vsel %vm209, %v369, -inf
    %372 = vmax.xlane.f32.xlu0 %v371
    %v373 = vpop.xlane.xlu0 %372
    %v374 = vsub.f32 %v369, %v373
    %v375 = vmul.f32 %v374, 1.442695
    %v376 = vpow.pop %v375
    %v377 = vsel %vm209, %v376, 0.0
    %378 = vadd.xlane.f32.xlu0 %v377
    %v379 = vpop.xlane.xlu0 %378
    %v380 = vrcp.pop %v379
    %v381 = vmul.f32 %v376, %v380
    %382 = vrot.lane.b32.xlu0 %v136, 112
    %v383 = vpop.permute.xlu0 %382
    %v386 = vsel %vm209, %v381, 0
    %388 = vmatpush.msra.mxu0 0.0
    %389 = vmatpush.msra.mxu0 0.0
    %390 = vmatpush.msra.mxu0 0.0
    %391 = vmatpush.msra.mxu0 0.0
    %392 = vmatpush.msra.mxu0 0.0
    %393 = vmatpush.msra.mxu0 0.0
    %394 = vmatpush.msra.mxu0 0.0
    %395 = vmatpush.msra.mxu0 0.0
    %396 = vmatpush.msra.mxu0 0.0
    %397 = vmatpush.msra.mxu0 0.0
    %398 = vmatpush.msra.mxu0 0.0
    %399 = vmatpush.msra.mxu0 0.0
    %400 = vmatpush.msra.mxu0 0.0
    %401 = vmatpush.msra.mxu0 0.0
    %402 = vmatpush.msra.mxu0 0.0
    %403 = vmatpush.msra.mxu0 %v383
    %404 = vmatmul.f32.gmra.mxu0 %v386
    %v405 = vpop.f32.mrf.mxu0
    %v406 = vadd.f32 0.0, %v405
    %407 = vdwg.mxu0
    %409 = vrot.lane.b32.xlu0 %v406, 16
    %v410 = vpop.permute.xlu0 %409
    %vm412 = vcmask 195712
    %413 = vst.msk [vmem:[#allocation2] sm:$0xff] %vm412, %v410
    %414 = vrot.lane.b32.xlu0 %v207, 104
    %v415 = vpop.permute.xlu0 %414
    %416 = vrot.lane.b32.xlu0 %v169, 104
    %v417 = vpop.permute.xlu0 %416
    %v418 = vsel %vm209, %v415, 0
    %v420 = vsel %vm209, %v417, 0
    %422 = vmatpush.xpose.msra.mxu0 0.0
    %423 = vmatpush.xpose.msra.mxu0 0.0
    %424 = vmatpush.xpose.msra.mxu0 0.0
    %425 = vmatpush.xpose.msra.mxu0 0.0
    %426 = vmatpush.xpose.msra.mxu0 0.0
    %427 = vmatpush.xpose.msra.mxu0 0.0
    %428 = vmatpush.xpose.msra.mxu0 0.0
    %429 = vmatpush.xpose.msra.mxu0 0.0
    %430 = vmatpush.xpose.msra.mxu0 0.0
    %431 = vmatpush.xpose.msra.mxu0 0.0
    %432 = vmatpush.xpose.msra.mxu0 0.0
    %433 = vmatpush.xpose.msra.mxu0 0.0
    %434 = vmatpush.xpose.msra.mxu0 0.0
    %435 = vmatpush.xpose.msra.mxu0 0.0
    %436 = vmatpush.xpose.msra.mxu0 0.0
    %437 = vmatpush.xpose.msra.mxu0 %v420
    %438 = vmatmul.f32.gmra.mxu0 %v418
    %v439 = vpop.f32.mrf.mxu0
    %v440 = vadd.f32 0.0, %v439
    %441 = vdwg.mxu0
    %v442 = vsel %vm209, %v440, -inf
    %443 = vmax.xlane.f32.xlu0 %v442
    %v444 = vpop.xlane.xlu0 %443
    %v445 = vsub.f32 %v440, %v444
    %v446 = vmul.f32 %v445, 1.442695
    %v447 = vpow.pop %v446
    %v448 = vsel %vm209, %v447, 0.0
    %449 = vadd.xlane.f32.xlu0 %v448
    %v450 = vpop.xlane.xlu0 %449
    %v451 = vrcp.pop %v450
    %v452 = vmul.f32 %v447, %v451
    %453 = vrot.lane.b32.xlu0 %v136, 104
    %v454 = vpop.permute.xlu0 %453
    %v457 = vsel %vm209, %v452, 0
    %459 = vmatpush.msra.mxu0 0.0
    %460 = vmatpush.msra.mxu0 0.0
    %461 = vmatpush.msra.mxu0 0.0
    %462 = vmatpush.msra.mxu0 0.0
    %463 = vmatpush.msra.mxu0 0.0
    %464 = vmatpush.msra.mxu0 0.0
    %465 = vmatpush.msra.mxu0 0.0
    %466 = vmatpush.msra.mxu0 0.0
    %467 = vmatpush.msra.mxu0 0.0
    %468 = vmatpush.msra.mxu0 0.0
    %469 = vmatpush.msra.mxu0 0.0
    %470 = vmatpush.msra.mxu0 0.0
    %471 = vmatpush.msra.mxu0 0.0
    %472 = vmatpush.msra.mxu0 0.0
    %473 = vmatpush.msra.mxu0 0.0
    %474 = vmatpush.msra.mxu0 %v454
    %475 = vmatmul.f32.gmra.mxu0 %v457
    %v476 = vpop.f32.mrf.mxu0
    %v477 = vadd.f32 0.0, %v476
    %478 = vdwg.mxu0
    %480 = vrot.lane.b32.xlu0 %v477, 24
    %v481 = vpop.permute.xlu0 %480
    %vm483 = vcmask 261312
    %484 = vst.msk [vmem:[#allocation2] sm:$0xff] %vm483, %v481
    %v486 = vsel %vm209, %v208, 0
    %v489 = vsel %vm209, %v172, 0
    %491 = vmatpush.xpose.msra.mxu0 0.0
    %492 = vmatpush.xpose.msra.mxu0 0.0
    %493 = vmatpush.xpose.msra.mxu0 0.0
    %494 = vmatpush.xpose.msra.mxu0 0.0
    %495 = vmatpush.xpose.msra.mxu0 0.0
    %496 = vmatpush.xpose.msra.mxu0 0.0
    %497 = vmatpush.xpose.msra.mxu0 0.0
    %498 = vmatpush.xpose.msra.mxu0 0.0
    %499 = vmatpush.xpose.msra.mxu0 0.0
    %500 = vmatpush.xpose.msra.mxu0 0.0
    %501 = vmatpush.xpose.msra.mxu0 0.0
    %502 = vmatpush.xpose.msra.mxu0 0.0
    %503 = vmatpush.xpose.msra.mxu0 0.0
    %504 = vmatpush.xpose.msra.mxu0 0.0
    %505 = vmatpush.xpose.msra.mxu0 0.0
    %506 = vmatpush.xpose.msra.mxu0 %v489
    %507 = vmatmul.f32.gmra.mxu0 %v486
    %v508 = vpop.f32.mrf.mxu0
    %v509 = vadd.f32 0.0, %v508
    %510 = vdwg.mxu0
    %v511 = vsel %vm209, %v509, -inf
    %512 = vmax.xlane.f32.xlu0 %v511
    %v513 = vpop.xlane.xlu0 %512
    %v514 = vsub.f32 %v509, %v513
    %v515 = vmul.f32 %v514, 1.442695
    %v516 = vpow.pop %v515
    %v517 = vsel %vm209, %v516, 0.0
    %518 = vadd.xlane.f32.xlu0 %v517
    %v519 = vpop.xlane.xlu0 %518
    %v520 = vrcp.pop %v519
    %v521 = vmul.f32 %v516, %v520
    %v523 = vsel %vm209, %v521, 0
    %525 = vmatpush.msra.mxu0 0.0
    %526 = vmatpush.msra.mxu0 0.0
    %527 = vmatpush.msra.mxu0 0.0
    %528 = vmatpush.msra.mxu0 0.0
    %529 = vmatpush.msra.mxu0 0.0
    %530 = vmatpush.msra.mxu0 0.0
    %531 = vmatpush.msra.mxu0 0.0
    %532 = vmatpush.msra.mxu0 0.0
    %533 = vmatpush.msra.mxu0 0.0
    %534 = vmatpush.msra.mxu0 0.0
    %535 = vmatpush.msra.mxu0 0.0
    %536 = vmatpush.msra.mxu0 0.0
    %537 = vmatpush.msra.mxu0 0.0
    %538 = vmatpush.msra.mxu0 0.0
    %539 = vmatpush.msra.mxu0 0.0
    %540 = vmatpush.msra.mxu0 %v139
    %541 = vmatmul.f32.gmra.mxu0 %v523
    %v542 = vpop.f32.mrf.mxu0
    %v543 = vadd.f32 0.0, %v542
    %544 = vdwg.mxu0
    %545 = vst.msk [vmem:[#allocation2 + $0x8] sm:$0xff] %vm209, %v543
    %546 = vrot.lane.b32.xlu0 %v208, 120
    %v547 = vpop.permute.xlu0 %546
    %548 = vrot.lane.b32.xlu0 %v172, 120
    %v549 = vpop.permute.xlu0 %548
    %v550 = vsel %vm209, %v547, 0
    %v552 = vsel %vm209, %v549, 0
    %554 = vmatpush.xpose.msra.mxu0 0.0
    %555 = vmatpush.xpose.msra.mxu0 0.0
    %556 = vmatpush.xpose.msra.mxu0 0.0
    %557 = vmatpush.xpose.msra.mxu0 0.0
    %558 = vmatpush.xpose.msra.mxu0 0.0
    %559 = vmatpush.xpose.msra.mxu0 0.0
    %560 = vmatpush.xpose.msra.mxu0 0.0
    %561 = vmatpush.xpose.msra.mxu0 0.0
    %562 = vmatpush.xpose.msra.mxu0 0.0
    %563 = vmatpush.xpose.msra.mxu0 0.0
    %564 = vmatpush.xpose.msra.mxu0 0.0
    %565 = vmatpush.xpose.msra.mxu0 0.0
    %566 = vmatpush.xpose.msra.mxu0 0.0
    %567 = vmatpush.xpose.msra.mxu0 0.0
    %568 = vmatpush.xpose.msra.mxu0 0.0
    %569 = vmatpush.xpose.msra.mxu0 %v552
    %570 = vmatmul.f32.gmra.mxu0 %v550
    %v571 = vpop.f32.mrf.mxu0
    %v572 = vadd.f32 0.0, %v571
    %573 = vdwg.mxu0
    %v574 = vsel %vm209, %v572, -inf
    %575 = vmax.xlane.f32.xlu0 %v574
    %v576 = vpop.xlane.xlu0 %575
    %v577 = vsub.f32 %v572, %v576
    %v578 = vmul.f32 %v577, 1.442695
    %v579 = vpow.pop %v578
    %v580 = vsel %vm209, %v579, 0.0
    %581 = vadd.xlane.f32.xlu0 %v580
    %v582 = vpop.xlane.xlu0 %581
    %v583 = vrcp.pop %v582
    %v584 = vmul.f32 %v579, %v583
    %586 = vrot.lane.b32.xlu0 %v139, 120
    %v587 = vpop.permute.xlu0 %586
    %v590 = vsel %vm209, %v584, 0
    %592 = vmatpush.msra.mxu0 0.0
    %593 = vmatpush.msra.mxu0 0.0
    %594 = vmatpush.msra.mxu0 0.0
    %595 = vmatpush.msra.mxu0 0.0
    %596 = vmatpush.msra.mxu0 0.0
    %597 = vmatpush.msra.mxu0 0.0
    %598 = vmatpush.msra.mxu0 0.0
    %599 = vmatpush.msra.mxu0 0.0
    %600 = vmatpush.msra.mxu0 0.0
    %601 = vmatpush.msra.mxu0 0.0
    %602 = vmatpush.msra.mxu0 0.0
    %603 = vmatpush.msra.mxu0 0.0
    %604 = vmatpush.msra.mxu0 0.0
    %605 = vmatpush.msra.mxu0 0.0
    %606 = vmatpush.msra.mxu0 0.0
    %607 = vmatpush.msra.mxu0 %v587
    %608 = vmatmul.f32.gmra.mxu0 %v590
    %v609 = vpop.f32.mrf.mxu0
    %v610 = vadd.f32 0.0, %v609
    %611 = vdwg.mxu0
    %613 = vrot.lane.b32.xlu0 %v610, 8
    %v614 = vpop.permute.xlu0 %613
    %616 = vst.msk [vmem:[#allocation2 + $0x8] sm:$0xff] %vm341, %v614
    %617 = vrot.lane.b32.xlu0 %v208, 112
    %v618 = vpop.permute.xlu0 %617
    %619 = vrot.lane.b32.xlu0 %v172, 112
    %v620 = vpop.permute.xlu0 %619
    %v621 = vsel %vm209, %v618, 0
    %v623 = vsel %vm209, %v620, 0
    %625 = vmatpush.xpose.msra.mxu0 0.0
    %626 = vmatpush.xpose.msra.mxu0 0.0
    %627 = vmatpush.xpose.msra.mxu0 0.0
    %628 = vmatpush.xpose.msra.mxu0 0.0
    %629 = vmatpush.xpose.msra.mxu0 0.0
    %630 = vmatpush.xpose.msra.mxu0 0.0
    %631 = vmatpush.xpose.msra.mxu0 0.0
    %632 = vmatpush.xpose.msra.mxu0 0.0
    %633 = vmatpush.xpose.msra.mxu0 0.0
    %634 = vmatpush.xpose.msra.mxu0 0.0
    %635 = vmatpush.xpose.msra.mxu0 0.0
    %636 = vmatpush.xpose.msra.mxu0 0.0
    %637 = vmatpush.xpose.msra.mxu0 0.0
    %638 = vmatpush.xpose.msra.mxu0 0.0
    %639 = vmatpush.xpose.msra.mxu0 0.0
    %640 = vmatpush.xpose.msra.mxu0 %v623
    %641 = vmatmul.f32.gmra.mxu0 %v621
    %v642 = vpop.f32.mrf.mxu0
    %v643 = vadd.f32 0.0, %v642
    %644 = vdwg.mxu0
    %v645 = vsel %vm209, %v643, -inf
    %646 = vmax.xlane.f32.xlu0 %v645
    %v647 = vpop.xlane.xlu0 %646
    %v648 = vsub.f32 %v643, %v647
    %v649 = vmul.f32 %v648, 1.442695
    %v650 = vpow.pop %v649
    %v651 = vsel %vm209, %v650, 0.0
    %652 = vadd.xlane.f32.xlu0 %v651
    %v653 = vpop.xlane.xlu0 %652
    %v654 = vrcp.pop %v653
    %v655 = vmul.f32 %v650, %v654
    %656 = vrot.lane.b32.xlu0 %v139, 112
    %v657 = vpop.permute.xlu0 %656
    %v660 = vsel %vm209, %v655, 0
    %662 = vmatpush.msra.mxu0 0.0
    %663 = vmatpush.msra.mxu0 0.0
    %664 = vmatpush.msra.mxu0 0.0
    %665 = vmatpush.msra.mxu0 0.0
    %666 = vmatpush.msra.mxu0 0.0
    %667 = vmatpush.msra.mxu0 0.0
    %668 = vmatpush.msra.mxu0 0.0
    %669 = vmatpush.msra.mxu0 0.0
    %670 = vmatpush.msra.mxu0 0.0
    %671 = vmatpush.msra.mxu0 0.0
    %672 = vmatpush.msra.mxu0 0.0
    %673 = vmatpush.msra.mxu0 0.0
    %674 = vmatpush.msra.mxu0 0.0
    %675 = vmatpush.msra.mxu0 0.0
    %676 = vmatpush.msra.mxu0 0.0
    %677 = vmatpush.msra.mxu0 %v657
    %678 = vmatmul.f32.gmra.mxu0 %v660
    %v679 = vpop.f32.mrf.mxu0
    %v680 = vadd.f32 0.0, %v679
    %681 = vdwg.mxu0
    %683 = vrot.lane.b32.xlu0 %v680, 16
    %v684 = vpop.permute.xlu0 %683
    %686 = vst.msk [vmem:[#allocation2 + $0x8] sm:$0xff] %vm412, %v684
    %687 = vrot.lane.b32.xlu0 %v208, 104
    %v688 = vpop.permute.xlu0 %687
    %689 = vrot.lane.b32.xlu0 %v172, 104
    %v690 = vpop.permute.xlu0 %689
    %v691 = vsel %vm209, %v688, 0
    %v693 = vsel %vm209, %v690, 0
    %695 = vmatpush.xpose.msra.mxu0 0.0
    %696 = vmatpush.xpose.msra.mxu0 0.0
    %697 = vmatpush.xpose.msra.mxu0 0.0
    %698 = vmatpush.xpose.msra.mxu0 0.0
    %699 = vmatpush.xpose.msra.mxu0 0.0
    %700 = vmatpush.xpose.msra.mxu0 0.0
    %701 = vmatpush.xpose.msra.mxu0 0.0
    %702 = vmatpush.xpose.msra.mxu0 0.0
    %703 = vmatpush.xpose.msra.mxu0 0.0
    %704 = vmatpush.xpose.msra.mxu0 0.0
    %705 = vmatpush.xpose.msra.mxu0 0.0
    %706 = vmatpush.xpose.msra.mxu0 0.0
    %707 = vmatpush.xpose.msra.mxu0 0.0
    %708 = vmatpush.xpose.msra.mxu0 0.0
    %709 = vmatpush.xpose.msra.mxu0 0.0
    %710 = vmatpush.xpose.msra.mxu0 %v693
    %711 = vmatmul.f32.gmra.mxu0 %v691
    %v712 = vpop.f32.mrf.mxu0
    %v713 = vadd.f32 0.0, %v712
    %714 = vdwg.mxu0
    %v715 = vsel %vm209, %v713, -inf
    %716 = vmax.xlane.f32.xlu0 %v715
    %v717 = vpop.xlane.xlu0 %716
    %v718 = vsub.f32 %v713, %v717
    %v719 = vmul.f32 %v718, 1.442695
    %v720 = vpow.pop %v719
    %v721 = vsel %vm209, %v720, 0.0
    %722 = vadd.xlane.f32.xlu0 %v721
    %v723 = vpop.xlane.xlu0 %722
    %v724 = vrcp.pop %v723
    %v725 = vmul.f32 %v720, %v724
    %726 = vrot.lane.b32.xlu0 %v139, 104
    %v727 = vpop.permute.xlu0 %726
    %v730 = vsel %vm209, %v725, 0
    %732 = vmatpush.msra.mxu0 0.0
    %733 = vmatpush.msra.mxu0 0.0
    %734 = vmatpush.msra.mxu0 0.0
    %735 = vmatpush.msra.mxu0 0.0
    %736 = vmatpush.msra.mxu0 0.0
    %737 = vmatpush.msra.mxu0 0.0
    %738 = vmatpush.msra.mxu0 0.0
    %739 = vmatpush.msra.mxu0 0.0
    %740 = vmatpush.msra.mxu0 0.0
    %741 = vmatpush.msra.mxu0 0.0
    %742 = vmatpush.msra.mxu0 0.0
    %743 = vmatpush.msra.mxu0 0.0
    %744 = vmatpush.msra.mxu0 0.0
    %745 = vmatpush.msra.mxu0 0.0
    %746 = vmatpush.msra.mxu0 0.0
    %747 = vmatpush.msra.mxu0 %v727
    %748 = vmatmul.f32.gmra.mxu0 %v730
    %v749 = vpop.f32.mrf.mxu0
    %v750 = vadd.f32 0.0, %v749
    %751 = vdwg.mxu0
    %753 = vrot.lane.b32.xlu0 %v750, 24
    %v754 = vpop.permute.xlu0 %753
    %756 = vst.msk [vmem:[#allocation2 + $0x8] sm:$0xff] %vm483, %v754
    %v757 = vld [vmem:[#allocation2] sm:$0xff]
    %v758 = vld [vmem:[#allocation2 + $0x8] sm:$0xff]
    %v759 = vld [vmem:[%s6] sm:$0xff]
    %v760 = vld [vmem:[%s6 + $0x8] sm:$0xff]
    %v761 = vld [vmem:[%s6 + $0x10] sm:$0xff]
    %v762 = vld [vmem:[%s6 + $0x18] sm:$0xff]
    %v763 = vld [vmem:[%s7] sm:$0x1]
    %v765 = vperm.slane %v763, 0
    %v768 = vsel %vm111, %v757, 0
    %v771 = vsel %vm111, %v758, 0
    %773 = vmatpush.msra.mxu0 0.0
    %774 = vmatpush.msra.mxu0 0.0
    %775 = vmatpush.msra.mxu0 0.0
    %776 = vmatpush.msra.mxu0 0.0
    %777 = vmatpush.msra.mxu0 0.0
    %778 = vmatpush.msra.mxu0 0.0
    %779 = vmatpush.msra.mxu0 0.0
    %780 = vmatpush.msra.mxu0 0.0
    %781 = vmatpush.msra.mxu0 0.0
    %782 = vmatpush.msra.mxu0 0.0
    %783 = vmatpush.msra.mxu0 0.0
    %784 = vmatpush.msra.mxu0 0.0
    %785 = vmatpush.msra.mxu0 %v762
    %786 = vmatpush.msra.mxu0 %v761
    %787 = vmatpush.msra.mxu0 %v760
    %788 = vmatpush.msra.mxu0 %v759
    %789 = vmatmul.f32.gmra.mxu0 %v768
    %v790 = vpop.f32.mrf.mxu0
    %v791 = vadd.f32 %v765, %v790
    %792 = vmatmul.f32.gmra.mxu0 %v771
    %v793 = vpop.f32.mrf.mxu0
    %v794 = vadd.f32 %v765, %v793
    %795 = vdwg.mxu0
    %v796 = vadd.f32 %v791, %v105
    %v797 = vadd.f32 %v794, %v106
    %v798 = vld [vmem:[%s8] sm:$0x1]
    %v799 = vld [vmem:[%s9] sm:$0x1]
    %v800 = vsel %vm111, %v796, 0.0
    %801 = vadd.xlane.f32.xlu0 %v800
    %v802 = vpop.xlane.xlu0 %801
    %v803 = vsel %vm111, %v797, 0.0
    %804 = vadd.xlane.f32.xlu0 %v803
    %v805 = vpop.xlane.xlu0 %804
    %v806 = vrcp.pop 32.0
    %v807 = vmul.f32 32.0, %v806
    %v808 = vsub.f32 1.0, %v807
    %v809 = vmul.f32 %v806, %v808
    %v810 = vadd.f32 %v806, %v809
    %vm811 = vweird.f32 %v806
    %v812 = vsel %vm811, %v806, %v810
    %v813 = vmul.f32 %v802, %v812
    %v814 = vmul.f32 %v805, %v812
    %v815 = vsub.f32 %v796, %v813
    %v816 = vsub.f32 %v797, %v814
    %v817 = vmul.f32 %v815, %v815
    %v818 = vmul.f32 %v816, %v816
    %v819 = vsel %vm111, %v817, 0.0
    %820 = vadd.xlane.f32.xlu0 %v819
    %v821 = vpop.xlane.xlu0 %820
    %v822 = vsel %vm111, %v818, 0.0
    %823 = vadd.xlane.f32.xlu0 %v822
    %v824 = vpop.xlane.xlu0 %823
    %v825 = vmul.f32 %v821, %v812
    %v826 = vmul.f32 %v824, %v812
    %v827 = vadd.f32 %v825, 1e-05
    %v828 = vadd.f32 %v826, 1e-05
    %v829 = vrsqrt.pop %v827
    %v830 = vmul.f32 %v829, %v827
    %v831 = vmul.f32 %v830, %v829
    %v832 = vmul.f32 0.5, %v831
    %v833 = vsub.f32 1.5, %v832
    %v834 = vmul.f32 %v829, %v833
    %vm835 = vweird.f32 %v827
    %vm836 = vweird.f32 %v829
    %vm837 = vmor %vm835, %vm836
    %v838 = vsel %vm837, %v829, %v834
    %v839 = vrsqrt.pop %v828
    %v840 = vmul.f32 %v839, %v828
    %v841 = vmul.f32 %v840, %v839
    %v842 = vmul.f32 0.5, %v841
    %v843 = vsub.f32 1.5, %v842
    %v844 = vmul.f32 %v839, %v843
    %vm845 = vweird.f32 %v828
    %vm846 = vweird.f32 %v839
    %vm847 = vmor %vm845, %vm846
    %v848 = vsel %vm847, %v839, %v844
    %v849 = vmul.f32 %v815, %v838
    %v850 = vmul.f32 %v816, %v848
    %v852 = vperm.slane %v798, 0
    %v854 = vmul.f32 %v849, %v852
    %v855 = vmul.f32 %v850, %v852
    %v857 = vperm.slane %v799, 0
    %v859 = vadd.f32 %v854, %v857
    %v860 = vadd.f32 %v855, %v857
    %v861 = vld [vmem:[%s10] sm:$0xff]
    %v862 = vld [vmem:[%s10 + $0x8] sm:$0xff]
    %v863 = vld [vmem:[%s10 + $0x10] sm:$0xff]
    %v864 = vld [vmem:[%s10 + $0x18] sm:$0xff]
    %v865 = vld [vmem:[%s11] sm:$0x1]
    %v867 = vperm.slane %v865, 0
    %v870 = vsel %vm111, %v859, 0
    %v873 = vsel %vm111, %v860, 0
    %875 = vmatpush.msra.mxu0 0.0
    %876 = vmatpush.msra.mxu0 0.0
    %877 = vmatpush.msra.mxu0 0.0
    %878 = vmatpush.msra.mxu0 0.0
    %879 = vmatpush.msra.mxu0 0.0
    %880 = vmatpush.msra.mxu0 0.0
    %881 = vmatpush.msra.mxu0 0.0
    %882 = vmatpush.msra.mxu0 0.0
    %883 = vmatpush.msra.mxu0 0.0
    %884 = vmatpush.msra.mxu0 0.0
    %885 = vmatpush.msra.mxu0 0.0
    %886 = vmatpush.msra.mxu0 0.0
    %887 = vmatpush.msra.mxu0 %v864
    %888 = vmatpush.msra.mxu0 %v863
    %889 = vmatpush.msra.mxu0 %v862
    %890 = vmatpush.msra.mxu0 %v861
    %891 = vmatmul.f32.gmra.mxu0 %v870
    %v892 = vpop.f32.mrf.mxu0
    %v893 = vadd.f32 %v867, %v892
    %894 = vmatmul.f32.gmra.mxu0 %v873
    %v895 = vpop.f32.mrf.mxu0
    %v896 = vadd.f32 %v867, %v895
    %897 = vdwg.mxu0
    %v898 = vmax.f32 %v893, 0.0
    %v899 = vmax.f32 %v896, 0.0
    %v900 = vld [vmem:[%s12] sm:$0xff]
    %v901 = vld [vmem:[%s12 + $0x8] sm:$0xff]
    %v902 = vld [vmem:[%s12 + $0x10] sm:$0xff]
    %v903 = vld [vmem:[%s12 + $0x18] sm:$0xff]
    %v904 = vld [vmem:[%s12 + $0x20] sm:$0xff]
    %v905 = vld [vmem:[%s12 + $0x28] sm:$0xff]
    %v906 = vld [vmem:[%s12 + $0x30] sm:$0xff]
    %v907 = vld [vmem:[%s12 + $0x38] sm:$0xff]
    %v908 = vld [vmem:[%s12 + $0x40] sm:$0xff]
    %v909 = vld [vmem:[%s12 + $0x48] sm:$0xff]
    %v910 = vld [vmem:[%s12 + $0x50] sm:$0xff]
    %v911 = vld [vmem:[%s12 + $0x58] sm:$0xff]
    %v912 = vld [vmem:[%s12 + $0x60] sm:$0xff]
    %v913 = vld [vmem:[%s12 + $0x68] sm:$0xff]
    %v914 = vld [vmem:[%s12 + $0x70] sm:$0xff]
    %v915 = vld [vmem:[%s12 + $0x78] sm:$0xff]
    %v916 = vld [vmem:[%s13] sm:$0x1]
    %v918 = vperm.slane %v916, 0
    %920 = vmatpush.msra.mxu0 %v915
    %921 = vmatpush.msra.mxu0 %v914
    %922 = vmatpush.msra.mxu0 %v913
    %923 = vmatpush.msra.mxu0 %v912
    %924 = vmatpush.msra.mxu0 %v911
    %925 = vmatpush.msra.mxu0 %v910
    %926 = vmatpush.msra.mxu0 %v909
    %927 = vmatpush.msra.mxu0 %v908
    %928 = vmatpush.msra.mxu0 %v907
    %929 = vmatpush.msra.mxu0 %v906
    %930 = vmatpush.msra.mxu0 %v905
    %931 = vmatpush.msra.mxu0 %v904
    %932 = vmatpush.msra.mxu0 %v903
    %933 = vmatpush.msra.mxu0 %v902
    %934 = vmatpush.msra.mxu0 %v901
    %935 = vmatpush.msra.mxu0 %v900
    %936 = vmatmul.f32.gmra.mxu0 %v898
    %v937 = vpop.f32.mrf.mxu0
    %v938 = vadd.f32 %v918, %v937
    %939 = vmatmul.f32.gmra.mxu0 %v899
    %v940 = vpop.f32.mrf.mxu0
    %v941 = vadd.f32 %v918, %v940
    %942 = vdwg.mxu0
    %v943 = vadd.f32 %v938, %v859
    %v944 = vadd.f32 %v941, %v860
    %v945 = vld [vmem:[%s14] sm:$0x1]
    %v946 = vld [vmem:[%s15] sm:$0x1]
    %v947 = vsel %vm111, %v943, 0.0
    %948 = vadd.xlane.f32.xlu0 %v947
    %v949 = vpop.xlane.xlu0 %948
    %v950 = vsel %vm111, %v944, 0.0
    %951 = vadd.xlane.f32.xlu0 %v950
    %v952 = vpop.xlane.xlu0 %951
    %v953 = vmul.f32 %v949, %v812
    %v954 = vmul.f32 %v952, %v812
    %v955 = vsub.f32 %v943, %v953
    %v956 = vsub.f32 %v944, %v954
    %v957 = vmul.f32 %v955, %v955
    %v958 = vmul.f32 %v956, %v956
    %v959 = vsel %vm111, %v957, 0.0
    %960 = vadd.xlane.f32.xlu0 %v959
    %v961 = vpop.xlane.xlu0 %960
    %v962 = vsel %vm111, %v958, 0.0
    %963 = vadd.xlane.f32.xlu0 %v962
    %v964 = vpop.xlane.xlu0 %963
    %v965 = vmul.f32 %v961, %v812
    %v966 = vmul.f32 %v964, %v812
    %v967 = vadd.f32 %v965, 1e-05
    %v968 = vadd.f32 %v966, 1e-05
    %v969 = vrsqrt.pop %v967
    %v970 = vmul.f32 %v969, %v967
    %v971 = vmul.f32 %v970, %v969
    %v972 = vmul.f32 0.5, %v971
    %v973 = vsub.f32 1.5, %v972
    %v974 = vmul.f32 %v969, %v973
    %vm975 = vweird.f32 %v967
    %vm976 = vweird.f32 %v969
    %vm977 = vmor %vm975, %vm976
    %v978 = vsel %vm977, %v969, %v974
    %v979 = vrsqrt.pop %v968
    %v980 = vmul.f32 %v979, %v968
    %v981 = vmul.f32 %v980, %v979
    %v982 = vmul.f32 0.5, %v981
    %v983 = vsub.f32 1.5, %v982
    %v984 = vmul.f32 %v979, %v983
    %vm985 = vweird.f32 %v968
    %vm986 = vweird.f32 %v979
    %vm987 = vmor %vm985, %vm986
    %v988 = vsel %vm987, %v979, %v984
    %v989 = vmul.f32 %v955, %v978
    %v990 = vmul.f32 %v956, %v988
    %v992 = vperm.slane %v945, 0
    %v994 = vmul.f32 %v989, %v992
    %v995 = vmul.f32 %v990, %v992
    %v997 = vperm.slane %v946, 0
    %v999 = vadd.f32 %v994, %v997
    %v1000 = vadd.f32 %v995, %v997
    %1001 = vst.msk [vmem:[#allocation9] sm:$0xff] %vm111, %v999
    %1002 = vst.msk [vmem:[#allocation9 + $0x8] sm:$0xff] %vm111, %v1000
    // Predicated region
    $region78: #{tpu_custom_call.1} parent=1 // pred_check
      _
    $region79: #{tpu_custom_call.1} parent=1 // pred_check_branch
      %1004 = sbr.rel (0) target = $region81
    $region80: #{tpu_custom_call.1} parent=1 // pred_region
      %1006 = vsyncadd [#allocation5], 0
      %s1007 = sshll.u32 [#allocation9], 4
      %s1008 = int_to_ptr.vmem [resolvable:$true] %s1007
      %s1009 = sshll.u32 %s16, 4
      %s1010 = int_to_ptr.hbm [resolvable:$true] %s1009
      %1015 = dma.vmem_to_hbm [thread:$0]  %s1008, 256, %s1010, [#allocation5], 128, 128, 8
    $region81: #{tpu_custom_call.1} parent=1 // pred_fallthru
      _
    // Predicated region
    $region82: #{tpu_custom_call.1} parent=1 // pred_check
      _
    $region83: #{tpu_custom_call.1} parent=1 // pred_check_branch
      %1017 = sbr.rel (0) target = $region85
    $region84: #{tpu_custom_call.1} parent=1 // pred_region
      %1019 = dma.done [#allocation5], 256
    $region85: #{tpu_custom_call.1} parent=1 // pred_fallthru
      _
    %1020 = vsyncpa [#allocation4], 1
    %1021 = vsyncpa [#allocation7], 1
    %1022 = vsyncpa [#allocation5], 1

</llo_original>
